<compile_context>
chip_gen: v5e
topology: v5e:2x2
jax: 0.10.0
libtpu: 0.0.40
codegen_flags: <defaults>
</compile_context>

<pallas_src>
from functools import partial

import jax
import jax.numpy as jnp
from jax.experimental import pallas as pl
from jax.experimental.pallas import tpu as pltpu


LANE = 128          # lane width: pad all feature dims to this
SUB = 8             # sublane width: pad the graph dim / small row counts to this
MAX_ROW_TILE = 512  # max rows (edges / nodes) per grid step


def _round_up(x, m):
    return (x + m - 1) // m * m


def _row_tile(rows, max_tile=MAX_ROW_TILE):
    """Pick the row-tile size and the padded row count.

    If rows <= max_tile we use one full-extent block (any multiple of 8 is a
    legal sublane extent when it equals the full array dim).  Otherwise we use
    max_tile (a multiple of 128, so it is also legal as a lane extent for the
    pooling matrix P)."""
    tile = min(max_tile, _round_up(max(rows, 1), SUB))
    return tile, _round_up(rows, tile)


def _pad2(a, shape):
    return jnp.pad(a, [(0, s - d) for d, s in zip(a.shape, shape)])


def _pad_bias(b, n):
    return jnp.pad(b.reshape(1, -1), ((0, 0), (0, n - b.shape[0])))


def _silu(x):
    return x * jax.nn.sigmoid(x)


# ----------------------------------------------------------------------------
# Kernel 1: 3-layer SiLU MLP (msg_fnc) over a row tile of edge features.
# ----------------------------------------------------------------------------
def mlp3_kernel(x_ref, w1_ref, b1_ref, w2_ref, b2_ref, w3_ref, b3_ref, o_ref):
    h = x_ref[...]
    h = _silu(jnp.dot(h, w1_ref[...], preferred_element_type=jnp.float32) + b1_ref[...])
    h = _silu(jnp.dot(h, w2_ref[...], preferred_element_type=jnp.float32) + b2_ref[...])
    o_ref[...] = jnp.dot(h, w3_ref[...], preferred_element_type=jnp.float32) + b3_ref[...]


def mlp3_pallas(xin, w1, b1, w2, b2, w3, b3, *, row_tile):
    rows, din = xin.shape
    hid = w1.shape[1]
    mout = w3.shape[1]
    const = lambda i: (0, 0)
    flops = 2 * rows * (din * hid + hid * hid + hid * mout)
    bytes_acc = 4 * (rows * din + din * hid + 2 * hid + hid * hid
                     + hid * mout + mout + rows * mout)
    return pl.pallas_call(
        mlp3_kernel,
        out_shape=jax.ShapeDtypeStruct((rows, mout), jnp.float32),
        grid=(rows // row_tile,),
        in_specs=[
            pl.BlockSpec((row_tile, din), lambda i: (i, 0)),
            pl.BlockSpec((din, hid), const),
            pl.BlockSpec((1, hid), const),
            pl.BlockSpec((hid, hid), const),
            pl.BlockSpec((1, hid), const),
            pl.BlockSpec((hid, mout), const),
            pl.BlockSpec((1, mout), const),
        ],
        out_specs=pl.BlockSpec((row_tile, mout), lambda i: (i, 0)),
        compiler_params=pltpu.CompilerParams(dimension_semantics=("parallel",)),
        cost_estimate=pl.CostEstimate(flops=flops, transcendentals=2 * rows * hid,
                                      bytes_accessed=bytes_acc),
    )(xin, w1, b1, w2, b2, w3, b3)


# ----------------------------------------------------------------------------
# Kernel 2: node_fnc MLP + mean-pool accumulation + (last step) global MLP.
#   Output is only the pooled [G_pad, n_predict_pad] block; per-node activations
#   never hit HBM.
# ----------------------------------------------------------------------------
def node_pool_kernel(nx_ref, p_ref,
                     w1_ref, b1_ref, w2_ref, b2_ref, w3_ref, b3_ref,
                     wg1_ref, bg1_ref, wg2_ref, bg2_ref,
                     o_ref, acc_ref):
    i = pl.program_id(0)

    @pl.when(i == 0)
    def _():
        acc_ref[...] = jnp.zeros_like(acc_ref)
        o_ref[...] = jnp.zeros_like(o_ref)

    h = nx_ref[...]
    h = _silu(jnp.dot(h, w1_ref[...], preferred_element_type=jnp.float32) + b1_ref[...])
    h = _silu(jnp.dot(h, w2_ref[...], preferred_element_type=jnp.float32) + b2_ref[...])
    h = jnp.dot(h, w3_ref[...], preferred_element_type=jnp.float32) + b3_ref[...]
    # global_mean_pool contribution of this node tile: acc += P_tile @ h
    acc_ref[...] += jnp.dot(p_ref[...], h, preferred_element_type=jnp.float32)

    @pl.when(i == pl.num_programs(0) - 1)
    def _():
        g = acc_ref[...]
        # F.dropout(p=0.5, training=False) is the identity in eval mode.
        # TODO(synk): training-mode dropout (RNG mask) intentionally not implemented.
        g = _silu(jnp.dot(g, wg1_ref[...], preferred_element_type=jnp.float32) + bg1_ref[...])
        o_ref[...] = jnp.dot(g, wg2_ref[...], preferred_element_type=jnp.float32) + bg2_ref[...]


def node_pool_pallas(node_in, P, nw1, nb1, nw2, nb2, nw3, nb3,
                     gw1, gb1, gw2, gb2, *, row_tile):
    rows, din = node_in.shape
    g_pad = P.shape[0]
    hid = nw1.shape[1]
    nh = nw3.shape[1]
    pred = gw2.shape[1]
    const = lambda i: (0, 0)
    flops = (2 * rows * (din * hid + hid * hid + hid * nh)
             + 2 * rows * g_pad * nh
             + 2 * g_pad * (nh * nh + nh * pred))
    bytes_acc = 4 * (rows * din + g_pad * rows + din * hid + 2 * hid + hid * hid
                     + hid * nh + nh + nh * nh + nh + nh * pred + pred + g_pad * pred)
    return pl.pallas_call(
        node_pool_kernel,
        out_shape=jax.ShapeDtypeStruct((g_pad, pred), jnp.float32),
        grid=(rows // row_tile,),
        in_specs=[
            pl.BlockSpec((row_tile, din), lambda i: (i, 0)),
            pl.BlockSpec((g_pad, row_tile), lambda i: (0, i)),
            pl.BlockSpec((din, hid), const),
            pl.BlockSpec((1, hid), const),
            pl.BlockSpec((hid, hid), const),
            pl.BlockSpec((1, hid), const),
            pl.BlockSpec((hid, nh), const),
            pl.BlockSpec((1, nh), const),
            pl.BlockSpec((nh, nh), const),
            pl.BlockSpec((1, nh), const),
            pl.BlockSpec((nh, pred), const),
            pl.BlockSpec((1, pred), const),
        ],
        out_specs=pl.BlockSpec((g_pad, pred), lambda i: (0, 0)),
        scratch_shapes=[pltpu.VMEM((g_pad, nh), jnp.float32)],
        compiler_params=pltpu.CompilerParams(dimension_semantics=("arbitrary",)),
        cost_estimate=pl.CostEstimate(flops=flops,
                                      transcendentals=2 * rows * hid + g_pad * nh,
                                      bytes_accessed=bytes_acc),
    )(node_in, P, nw1, nb1, nw2, nb2, nw3, nb3, gw1, gb1, gw2, gb2)


# ----------------------------------------------------------------------------
# Full forward pass (eval mode).
# ----------------------------------------------------------------------------
def gnpools_mlp_forward(x, edge_index, edge_attr, batch, params, *, num_graphs):
    N, n_f = x.shape
    E, _ = edge_attr.shape
    (mw1, mb1), (mw2, mb2), (mw3, mb3) = params["msg"]
    (nw1, nb1), (nw2, nb2), (nw3, nb3) = params["node"]
    (gw1, gb1), (gw2, gb2) = params["glob"]
    hidden = mw1.shape[1]
    msg_dim = mw3.shape[1]
    n_hidden = nw3.shape[1]
    n_predict = gw2.shape[1]

    x = x.astype(jnp.float32)
    edge_attr = edge_attr.astype(jnp.float32)
    src, dst = edge_index[0], edge_index[1]   # PyG flow: x_j = x[src], x_i = x[dst]

    # --- msg_fnc over edges (Pallas) ---
    edge_in = jnp.concatenate([x[dst], x[src], edge_attr], axis=1)  # [E, 2*n_f + n_ef]
    din1 = edge_in.shape[1]
    e_tile, E_pad = _row_tile(E)
    din1_p = _round_up(din1, LANE)
    hid_p = _round_up(hidden, LANE)
    msg_p = _round_up(msg_dim, LANE)

    msg_pad = mlp3_pallas(
        _pad2(edge_in, (E_pad, din1_p)),
        _pad2(mw1, (din1_p, hid_p)), _pad_bias(mb1, hid_p),
        _pad2(mw2, (hid_p, hid_p)), _pad_bias(mb2, hid_p),
        _pad2(mw3, (hid_p, msg_p)), _pad_bias(mb3, msg_p),
        row_tile=e_tile,
    )
    msg = msg_pad[:E, :msg_dim]

    # --- aggr='add' scatter of messages onto target nodes (graph glue, JAX) ---
    aggr = jnp.zeros((N, msg_dim), jnp.float32).at[dst].add(msg)

    # --- node_fnc + global_mean_pool + global_mlp (Pallas, fused) ---
    node_in = jnp.concatenate([x, aggr], axis=1)                    # [N, n_f + msg_dim]
    din2 = node_in.shape[1]
    n_tile, N_pad = _row_tile(N)
    din2_p = _round_up(din2, LANE)
    nh_p = _round_up(n_hidden, LANE)
    pr_p = _round_up(n_predict, LANE)
    G_pad = _round_up(num_graphs, SUB)

    onehot = (batch[None, :] == jnp.arange(num_graphs, dtype=batch.dtype)[:, None])
    onehot = onehot.astype(jnp.float32)
    counts = jnp.maximum(onehot.sum(axis=1, keepdims=True), 1.0)
    P = _pad2(onehot / counts, (G_pad, N_pad))  # padded nodes/graphs get zero weight

    out_pad = node_pool_pallas(
        _pad2(node_in, (N_pad, din2_p)), P,
        _pad2(nw1, (din2_p, hid_p)), _pad_bias(nb1, hid_p),
        _pad2(nw2, (hid_p, hid_p)), _pad_bias(nb2, hid_p),
        _pad2(nw3, (hid_p, nh_p)), _pad_bias(nb3, nh_p),
        _pad2(gw1, (nh_p, nh_p)), _pad_bias(gb1, nh_p),
        _pad2(gw2, (nh_p, pr_p)), _pad_bias(gb2, pr_p),
        row_tile=n_tile,
    )
    return out_pad[:num_graphs, :n_predict]


# ----------------------------------------------------------------------------
# Parameter init (torch Linear defaults: U(-1/sqrt(fan_in), 1/sqrt(fan_in))),
# weights stored [in, out] (transposed vs torch).
# ----------------------------------------------------------------------------
def _init_linear(key, fan_in, fan_out):
    kw, kb = jax.random.split(key)
    lim = 1.0 / jnp.sqrt(float(fan_in))
    W = jax.random.uniform(kw, (fan_in, fan_out), jnp.float32, -lim, lim)
    b = jax.random.uniform(kb, (fan_out,), jnp.float32, -lim, lim)
    return W, b


def init_params(key, n_nf, n_ef, msg_dim, n_hidden, n_predict, hidden=300):
    ks = jax.random.split(key, 8)
    msg = [_init_linear(ks[0], 2 * n_nf + n_ef, hidden),
           _init_linear(ks[1], hidden, hidden),
           _init_linear(ks[2], hidden, msg_dim)]
    node = [_init_linear(ks[3], msg_dim + n_nf, hidden),
            _init_linear(ks[4], hidden, hidden),
            _init_linear(ks[5], hidden, n_hidden)]
    glob = [_init_linear(ks[6], n_hidden, n_hidden),
            _init_linear(ks[7], n_hidden, n_predict)]
    return {"msg": msg, "node": node, "glob": glob}


if __name__ == "__main__":
    # Small deterministic example: 2 graphs of 8 nodes, bidirectional ring edges.
    n_nf, n_ef, msg_dim, n_hidden, n_predict = 4, 2, 8, 32, 4
    hidden = 300  # GNswish internal MLP width (module default)
    nodes_per_graph, num_graphs = 8, 2
    N = nodes_per_graph * num_graphs

    key = jax.random.PRNGKey(0)
    kx, ke, kp = jax.random.split(key, 3)

    x = jax.random.normal(kx, (N, n_nf), jnp.float32)

    src_list, dst_list = [], []
    for g in range(num_graphs):
        base = g * nodes_per_graph
        for i in range(nodes_per_graph):
            u, v = base + i, base + (i + 1) % nodes_per_graph
            src_list += [u, v]
            dst_list += [v, u]
    edge_index = jnp.array([src_list, dst_list], dtype=jnp.int32)  # [2, E]
    E = edge_index.shape[1]
    edge_attr = jax.random.normal(ke, (E, n_ef), jnp.float32)
    batch = jnp.repeat(jnp.arange(num_graphs, dtype=jnp.int32), nodes_per_graph)

    params = init_params(kp, n_nf, n_ef, msg_dim, n_hidden, n_predict, hidden=hidden)

    forward = jax.jit(partial(gnpools_mlp_forward, num_graphs=num_graphs))
    out = forward(x, edge_index, edge_attr, batch, params)
    jax.block_until_ready(out)
    assert out.shape == (num_graphs, n_predict)
    print("KERNEL_OK")
</pallas_src>

<mosaic_0001>
module attributes {stable_mosaic.version = 11 : i64} {
  func.func @mlp3_kernel(%arg0: i32, %arg1: memref<32x128xf32, #tpu.memory_space<vmem>>, %arg2: memref<128x384xf32, #tpu.memory_space<vmem>>, %arg3: memref<1x384xf32, #tpu.memory_space<vmem>>, %arg4: memref<384x384xf32, #tpu.memory_space<vmem>>, %arg5: memref<1x384xf32, #tpu.memory_space<vmem>>, %arg6: memref<384x128xf32, #tpu.memory_space<vmem>>, %arg7: memref<1x128xf32, #tpu.memory_space<vmem>>, %arg8: memref<32x128xf32, #tpu.memory_space<vmem>>) attributes {dimension_semantics = [#tpu.dimension_semantics<parallel>], iteration_bounds = array<i64: 1>, scalar_prefetch = 0 : i64, scratch_operands = 0 : i64, tpu.core_type = #tpu.core_type<tc>, window_params = [{transform_indices = @transform_0, window_bounds = array<i64: 32, 128>}, {pipeline_mode = #tpu.pipeline_mode<synchronous>, transform_indices = @transform_1, window_bounds = array<i64: 128, 384>}, {pipeline_mode = #tpu.pipeline_mode<synchronous>, transform_indices = @transform_2, window_bounds = array<i64: 1, 384>}, {pipeline_mode = #tpu.pipeline_mode<synchronous>, transform_indices = @transform_3, window_bounds = array<i64: 384, 384>}, {pipeline_mode = #tpu.pipeline_mode<synchronous>, transform_indices = @transform_4, window_bounds = array<i64: 1, 384>}, {pipeline_mode = #tpu.pipeline_mode<synchronous>, transform_indices = @transform_5, window_bounds = array<i64: 384, 128>}, {pipeline_mode = #tpu.pipeline_mode<synchronous>, transform_indices = @transform_6, window_bounds = array<i64: 1, 128>}, {transform_indices = @transform_7, window_bounds = array<i64: 32, 128>}]} {
    %c0 = arith.constant 0 : index
    %c0_0 = arith.constant 0 : index
    %0 = vector.load %arg1[%c0, %c0_0] : memref<32x128xf32, #tpu.memory_space<vmem>>, vector<32x128xf32>
    %c0_1 = arith.constant 0 : index
    %c0_2 = arith.constant 0 : index
    %1 = vector.load %arg2[%c0_1, %c0_2] : memref<128x384xf32, #tpu.memory_space<vmem>>, vector<128x384xf32>
    %cst = arith.constant dense<0.000000e+00> : vector<32x384xf32>
    %2 = tpu.matmul %0, %1, %cst {dimension_numbers = #tpu.dot_dimension_numbers<[1], [0], [0], [1], [0, 0, 1, 1], [], []>} : vector<32x128xf32>, vector<128x384xf32>, vector<32x384xf32> -> vector<32x384xf32>
    %c0_3 = arith.constant 0 : index
    %c0_4 = arith.constant 0 : index
    %3 = vector.load %arg3[%c0_3, %c0_4] : memref<1x384xf32, #tpu.memory_space<vmem>>, vector<1x384xf32>
    %4 = vector.broadcast %3 : vector<1x384xf32> to vector<32x384xf32>
    %5 = arith.addf %2, %4 : vector<32x384xf32>
    %6 = arith.negf %5 : vector<32x384xf32>
    %7 = math.exp %6 : vector<32x384xf32>
    %cst_5 = arith.constant 1.000000e+00 : f32
    %8 = vector.broadcast %cst_5 : f32 to vector<32x384xf32>
    %9 = arith.addf %8, %7 : vector<32x384xf32>
    %10 = arith.divf %8, %9 : vector<32x384xf32>
    %11 = arith.mulf %5, %10 : vector<32x384xf32>
    %c0_6 = arith.constant 0 : index
    %c0_7 = arith.constant 0 : index
    %12 = vector.load %arg4[%c0_6, %c0_7] : memref<384x384xf32, #tpu.memory_space<vmem>>, vector<384x384xf32>
    %cst_8 = arith.constant dense<0.000000e+00> : vector<32x384xf32>
    %13 = tpu.matmul %11, %12, %cst_8 {dimension_numbers = #tpu.dot_dimension_numbers<[1], [0], [0], [1], [0, 0, 1, 1], [], []>} : vector<32x384xf32>, vector<384x384xf32>, vector<32x384xf32> -> vector<32x384xf32>
    %c0_9 = arith.constant 0 : index
    %c0_10 = arith.constant 0 : index
    %14 = vector.load %arg5[%c0_9, %c0_10] : memref<1x384xf32, #tpu.memory_space<vmem>>, vector<1x384xf32>
    %15 = vector.broadcast %14 : vector<1x384xf32> to vector<32x384xf32>
    %16 = arith.addf %13, %15 : vector<32x384xf32>
    %17 = arith.negf %16 : vector<32x384xf32>
    %18 = math.exp %17 : vector<32x384xf32>
    %cst_11 = arith.constant 1.000000e+00 : f32
    %19 = vector.broadcast %cst_11 : f32 to vector<32x384xf32>
    %20 = arith.addf %19, %18 : vector<32x384xf32>
    %21 = arith.divf %19, %20 : vector<32x384xf32>
    %22 = arith.mulf %16, %21 : vector<32x384xf32>
    %c0_12 = arith.constant 0 : index
    %c0_13 = arith.constant 0 : index
    %23 = vector.load %arg6[%c0_12, %c0_13] : memref<384x128xf32, #tpu.memory_space<vmem>>, vector<384x128xf32>
    %cst_14 = arith.constant dense<0.000000e+00> : vector<32x128xf32>
    %24 = tpu.matmul %22, %23, %cst_14 {dimension_numbers = #tpu.dot_dimension_numbers<[1], [0], [0], [1], [0, 0, 1, 1], [], []>} : vector<32x384xf32>, vector<384x128xf32>, vector<32x128xf32> -> vector<32x128xf32>
    %c0_15 = arith.constant 0 : index
    %c0_16 = arith.constant 0 : index
    %25 = vector.load %arg7[%c0_15, %c0_16] : memref<1x128xf32, #tpu.memory_space<vmem>>, vector<1x128xf32>
    %26 = vector.broadcast %25 : vector<1x128xf32> to vector<32x128xf32>
    %27 = arith.addf %24, %26 : vector<32x128xf32>
    %c0_17 = arith.constant 0 : index
    %c0_18 = arith.constant 0 : index
    %28 = vector.load %arg8[%c0_17, %c0_18] : memref<32x128xf32, #tpu.memory_space<vmem>>, vector<32x128xf32>
    tpu.vector_store %arg8[%c0_17, %c0_18], %27 {strides = array<i32>} : memref<32x128xf32, #tpu.memory_space<vmem>>, vector<32x128xf32>,
    return
  }
  func.func @transform_0(%arg0: i32) -> (i32, i32) {
    %c0_i32 = arith.constant 0 : i32
    %c0_i32_0 = arith.constant 0 : i32
    return %arg0, %c0_i32 : i32, i32
  }
  func.func @transform_1(%arg0: i32) -> (i32, i32) {
    %c0_i32 = arith.constant 0 : i32
    %c0_i32_0 = arith.constant 0 : i32
    %c0_i32_1 = arith.constant 0 : i32
    return %c0_i32, %c0_i32_0 : i32, i32
  }
  func.func @transform_2(%arg0: i32) -> (i32, i32) {
    %c0_i32 = arith.constant 0 : i32
    %c0_i32_0 = arith.constant 0 : i32
    %c0_i32_1 = arith.constant 0 : i32
    return %c0_i32, %c0_i32_0 : i32, i32
  }
  func.func @transform_3(%arg0: i32) -> (i32, i32) {
    %c0_i32 = arith.constant 0 : i32
    %c0_i32_0 = arith.constant 0 : i32
    %c0_i32_1 = arith.constant 0 : i32
    return %c0_i32, %c0_i32_0 : i32, i32
  }
  func.func @transform_4(%arg0: i32) -> (i32, i32) {
    %c0_i32 = arith.constant 0 : i32
    %c0_i32_0 = arith.constant 0 : i32
    %c0_i32_1 = arith.constant 0 : i32
    return %c0_i32, %c0_i32_0 : i32, i32
  }
  func.func @transform_5(%arg0: i32) -> (i32, i32) {
    %c0_i32 = arith.constant 0 : i32
    %c0_i32_0 = arith.constant 0 : i32
    %c0_i32_1 = arith.constant 0 : i32
    return %c0_i32, %c0_i32_0 : i32, i32
  }
  func.func @transform_6(%arg0: i32) -> (i32, i32) {
    %c0_i32 = arith.constant 0 : i32
    %c0_i32_0 = arith.constant 0 : i32
    %c0_i32_1 = arith.constant 0 : i32
    return %c0_i32, %c0_i32_0 : i32, i32
  }
  func.func @transform_7(%arg0: i32) -> (i32, i32) {
    %c0_i32 = arith.constant 0 : i32
    %c0_i32_0 = arith.constant 0 : i32
    return %arg0, %c0_i32 : i32, i32
  }
}

module attributes {stable_mosaic.version = 11 : i64} {
  func.func @node_pool_kernel(%arg0: i32, %arg1: memref<16x128xf32, #tpu.memory_space<vmem>>, %arg2: memref<8x16xf32, #tpu.memory_space<vmem>>, %arg3: memref<128x384xf32, #tpu.memory_space<vmem>>, %arg4: memref<1x384xf32, #tpu.memory_space<vmem>>, %arg5: memref<384x384xf32, #tpu.memory_space<vmem>>, %arg6: memref<1x384xf32, #tpu.memory_space<vmem>>, %arg7: memref<384x128xf32, #tpu.memory_space<vmem>>, %arg8: memref<1x128xf32, #tpu.memory_space<vmem>>, %arg9: memref<128x128xf32, #tpu.memory_space<vmem>>, %arg10: memref<1x128xf32, #tpu.memory_space<vmem>>, %arg11: memref<128x128xf32, #tpu.memory_space<vmem>>, %arg12: memref<1x128xf32, #tpu.memory_space<vmem>>, %arg13: memref<8x128xf32, #tpu.memory_space<vmem>>, %arg14: memref<8x128xf32, #tpu.memory_space<vmem>>) attributes {dimension_semantics = [#tpu.dimension_semantics<arbitrary>], iteration_bounds = array<i64: 1>, scalar_prefetch = 0 : i64, scratch_operands = 1 : i64, tpu.core_type = #tpu.core_type<tc>, window_params = [{transform_indices = @transform_0, window_bounds = array<i64: 16, 128>}, {transform_indices = @transform_1, window_bounds = array<i64: 8, 16>}, {pipeline_mode = #tpu.pipeline_mode<synchronous>, transform_indices = @transform_2, window_bounds = array<i64: 128, 384>}, {pipeline_mode = #tpu.pipeline_mode<synchronous>, transform_indices = @transform_3, window_bounds = array<i64: 1, 384>}, {pipeline_mode = #tpu.pipeline_mode<synchronous>, transform_indices = @transform_4, window_bounds = array<i64: 384, 384>}, {pipeline_mode = #tpu.pipeline_mode<synchronous>, transform_indices = @transform_5, window_bounds = array<i64: 1, 384>}, {pipeline_mode = #tpu.pipeline_mode<synchronous>, transform_indices = @transform_6, window_bounds = array<i64: 384, 128>}, {pipeline_mode = #tpu.pipeline_mode<synchronous>, transform_indices = @transform_7, window_bounds = array<i64: 1, 128>}, {pipeline_mode = #tpu.pipeline_mode<synchronous>, transform_indices = @transform_8, window_bounds = array<i64: 128, 128>}, {pipeline_mode = #tpu.pipeline_mode<synchronous>, transform_indices = @transform_9, window_bounds = array<i64: 1, 128>}, {pipeline_mode = #tpu.pipeline_mode<synchronous>, transform_indices = @transform_10, window_bounds = array<i64: 128, 128>}, {pipeline_mode = #tpu.pipeline_mode<synchronous>, transform_indices = @transform_11, window_bounds = array<i64: 1, 128>}, {pipeline_mode = #tpu.pipeline_mode<synchronous>, transform_indices = @transform_12, window_bounds = array<i64: 8, 128>}]} {
    %c0_i32 = arith.constant 0 : i32
    %0 = arith.cmpi eq, %arg0, %c0_i32 : i32
    %1 = arith.extui %0 : i1 to i32
    %c0_i32_0 = arith.constant 0 : i32
    %2 = arith.cmpi ne, %1, %c0_i32_0 : i32
    scf.if %2 {
      %cst_27 = arith.constant 0.000000e+00 : f32
      %39 = vector.broadcast %cst_27 : f32 to vector<8x128xf32>
      %c0_28 = arith.constant 0 : index
      %c0_29 = arith.constant 0 : index
      %40 = vector.load %arg14[%c0_28, %c0_29] : memref<8x128xf32, #tpu.memory_space<vmem>>, vector<8x128xf32>
      tpu.vector_store %arg14[%c0_28, %c0_29], %39 {strides = array<i32>} : memref<8x128xf32, #tpu.memory_space<vmem>>, vector<8x128xf32>,
      %cst_30 = arith.constant 0.000000e+00 : f32
      %41 = vector.broadcast %cst_30 : f32 to vector<8x128xf32>
      %c0_31 = arith.constant 0 : index
      %c0_32 = arith.constant 0 : index
      %42 = vector.load %arg13[%c0_31, %c0_32] : memref<8x128xf32, #tpu.memory_space<vmem>>, vector<8x128xf32>
      tpu.vector_store %arg13[%c0_31, %c0_32], %41 {strides = array<i32>} : memref<8x128xf32, #tpu.memory_space<vmem>>, vector<8x128xf32>,
    } else {
    }
    %c0 = arith.constant 0 : index
    %c0_1 = arith.constant 0 : index
    %3 = vector.load %arg1[%c0, %c0_1] : memref<16x128xf32, #tpu.memory_space<vmem>>, vector<16x128xf32>
    %c0_2 = arith.constant 0 : index
    %c0_3 = arith.constant 0 : index
    %4 = vector.load %arg3[%c0_2, %c0_3] : memref<128x384xf32, #tpu.memory_space<vmem>>, vector<128x384xf32>
    %cst = arith.constant dense<0.000000e+00> : vector<16x384xf32>
    %5 = tpu.matmul %3, %4, %cst {dimension_numbers = #tpu.dot_dimension_numbers<[1], [0], [0], [1], [0, 0, 1, 1], [], []>} : vector<16x128xf32>, vector<128x384xf32>, vector<16x384xf32> -> vector<16x384xf32>
    %c0_4 = arith.constant 0 : index
    %c0_5 = arith.constant 0 : index
    %6 = vector.load %arg4[%c0_4, %c0_5] : memref<1x384xf32, #tpu.memory_space<vmem>>, vector<1x384xf32>
    %7 = vector.broadcast %6 : vector<1x384xf32> to vector<16x384xf32>
    %8 = arith.addf %5, %7 : vector<16x384xf32>
    %9 = arith.negf %8 : vector<16x384xf32>
    %10 = math.exp %9 : vector<16x384xf32>
    %cst_6 = arith.constant 1.000000e+00 : f32
    %11 = vector.broadcast %cst_6 : f32 to vector<16x384xf32>
    %12 = arith.addf %11, %10 : vector<16x384xf32>
    %13 = arith.divf %11, %12 : vector<16x384xf32>
    %14 = arith.mulf %8, %13 : vector<16x384xf32>
    %c0_7 = arith.constant 0 : index
    %c0_8 = arith.constant 0 : index
    %15 = vector.load %arg5[%c0_7, %c0_8] : memref<384x384xf32, #tpu.memory_space<vmem>>, vector<384x384xf32>
    %cst_9 = arith.constant dense<0.000000e+00> : vector<16x384xf32>
    %16 = tpu.matmul %14, %15, %cst_9 {dimension_numbers = #tpu.dot_dimension_numbers<[1], [0], [0], [1], [0, 0, 1, 1], [], []>} : vector<16x384xf32>, vector<384x384xf32>, vector<16x384xf32> -> vector<16x384xf32>
    %c0_10 = arith.constant 0 : index
    %c0_11 = arith.constant 0 : index
    %17 = vector.load %arg6[%c0_10, %c0_11] : memref<1x384xf32, #tpu.memory_space<vmem>>, vector<1x384xf32>
    %18 = vector.broadcast %17 : vector<1x384xf32> to vector<16x384xf32>
    %19 = arith.addf %16, %18 : vector<16x384xf32>
    %20 = arith.negf %19 : vector<16x384xf32>
    %21 = math.exp %20 : vector<16x384xf32>
    %cst_12 = arith.constant 1.000000e+00 : f32
    %22 = vector.broadcast %cst_12 : f32 to vector<16x384xf32>
    %23 = arith.addf %22, %21 : vector<16x384xf32>
    %24 = arith.divf %22, %23 : vector<16x384xf32>
    %25 = arith.mulf %19, %24 : vector<16x384xf32>
    %c0_13 = arith.constant 0 : index
    %c0_14 = arith.constant 0 : index
    %26 = vector.load %arg7[%c0_13, %c0_14] : memref<384x128xf32, #tpu.memory_space<vmem>>, vector<384x128xf32>
    %cst_15 = arith.constant dense<0.000000e+00> : vector<16x128xf32>
    %27 = tpu.matmul %25, %26, %cst_15 {dimension_numbers = #tpu.dot_dimension_numbers<[1], [0], [0], [1], [0, 0, 1, 1], [], []>} : vector<16x384xf32>, vector<384x128xf32>, vector<16x128xf32> -> vector<16x128xf32>
    %c0_16 = arith.constant 0 : index
    %c0_17 = arith.constant 0 : index
    %28 = vector.load %arg8[%c0_16, %c0_17] : memref<1x128xf32, #tpu.memory_space<vmem>>, vector<1x128xf32>
    %29 = vector.broadcast %28 : vector<1x128xf32> to vector<16x128xf32>
    %30 = arith.addf %27, %29 : vector<16x128xf32>
    %c0_18 = arith.constant 0 : index
    %c0_19 = arith.constant 0 : index
    %31 = vector.load %arg14[%c0_18, %c0_19] : memref<8x128xf32, #tpu.memory_space<vmem>>, vector<8x128xf32>
    %c0_20 = arith.constant 0 : index
    %c0_21 = arith.constant 0 : index
    %32 = vector.load %arg2[%c0_20, %c0_21] : memref<8x16xf32, #tpu.memory_space<vmem>>, vector<8x16xf32>
    %cst_22 = arith.constant dense<0.000000e+00> : vector<8x128xf32>
    %33 = tpu.matmul %32, %30, %cst_22 {dimension_numbers = #tpu.dot_dimension_numbers<[1], [0], [0], [1], [0, 0, 1, 1], [], []>} : vector<8x16xf32>, vector<16x128xf32>, vector<8x128xf32> -> vector<8x128xf32>
    %34 = arith.addf %31, %33 : vector<8x128xf32>
    %c0_23 = arith.constant 0 : index
    %c0_24 = arith.constant 0 : index
    %35 = vector.load %arg14[%c0_23, %c0_24] : memref<8x128xf32, #tpu.memory_space<vmem>>, vector<8x128xf32>
    tpu.vector_store %arg14[%c0_23, %c0_24], %34 {strides = array<i32>} : memref<8x128xf32, #tpu.memory_space<vmem>>, vector<8x128xf32>,
    %c0_i32_25 = arith.constant 0 : i32
    %36 = arith.cmpi eq, %arg0, %c0_i32_25 : i32
    %37 = arith.extui %36 : i1 to i32
    %c0_i32_26 = arith.constant 0 : i32
    %38 = arith.cmpi ne, %37, %c0_i32_26 : i32
    scf.if %38 {
      %c0_27 = arith.constant 0 : index
      %c0_28 = arith.constant 0 : index
      %39 = vector.load %arg14[%c0_27, %c0_28] : memref<8x128xf32, #tpu.memory_space<vmem>>, vector<8x128xf32>
      %c0_29 = arith.constant 0 : index
      %c0_30 = arith.constant 0 : index
      %40 = vector.load %arg9[%c0_29, %c0_30] : memref<128x128xf32, #tpu.memory_space<vmem>>, vector<128x128xf32>
      %cst_31 = arith.constant dense<0.000000e+00> : vector<8x128xf32>
      %41 = tpu.matmul %39, %40, %cst_31 {dimension_numbers = #tpu.dot_dimension_numbers<[1], [0], [0], [1], [0, 0, 1, 1], [], []>} : vector<8x128xf32>, vector<128x128xf32>, vector<8x128xf32> -> vector<8x128xf32>
      %c0_32 = arith.constant 0 : index
      %c0_33 = arith.constant 0 : index
      %42 = vector.load %arg10[%c0_32, %c0_33] : memref<1x128xf32, #tpu.memory_space<vmem>>, vector<1x128xf32>
      %43 = vector.broadcast %42 : vector<1x128xf32> to vector<8x128xf32>
      %44 = arith.addf %41, %43 : vector<8x128xf32>
      %45 = arith.negf %44 : vector<8x128xf32>
      %46 = math.exp %45 : vector<8x128xf32>
      %cst_34 = arith.constant 1.000000e+00 : f32
      %47 = vector.broadcast %cst_34 : f32 to vector<8x128xf32>
      %48 = arith.addf %47, %46 : vector<8x128xf32>
      %49 = arith.divf %47, %48 : vector<8x128xf32>
      %50 = arith.mulf %44, %49 : vector<8x128xf32>
      %c0_35 = arith.constant 0 : index
      %c0_36 = arith.constant 0 : index
      %51 = vector.load %arg11[%c0_35, %c0_36] : memref<128x128xf32, #tpu.memory_space<vmem>>, vector<128x128xf32>
      %cst_37 = arith.constant dense<0.000000e+00> : vector<8x128xf32>
      %52 = tpu.matmul %50, %51, %cst_37 {dimension_numbers = #tpu.dot_dimension_numbers<[1], [0], [0], [1], [0, 0, 1, 1], [], []>} : vector<8x128xf32>, vector<128x128xf32>, vector<8x128xf32> -> vector<8x128xf32>
      %c0_38 = arith.constant 0 : index
      %c0_39 = arith.constant 0 : index
      %53 = vector.load %arg12[%c0_38, %c0_39] : memref<1x128xf32, #tpu.memory_space<vmem>>, vector<1x128xf32>
      %54 = vector.broadcast %53 : vector<1x128xf32> to vector<8x128xf32>
      %55 = arith.addf %52, %54 : vector<8x128xf32>
      %c0_40 = arith.constant 0 : index
      %c0_41 = arith.constant 0 : index
      %56 = vector.load %arg13[%c0_40, %c0_41] : memref<8x128xf32, #tpu.memory_space<vmem>>, vector<8x128xf32>
      tpu.vector_store %arg13[%c0_40, %c0_41], %55 {strides = array<i32>} : memref<8x128xf32, #tpu.memory_space<vmem>>, vector<8x128xf32>,
    } else {
    }
    return
  }
  func.func @transform_0(%arg0: i32) -> (i32, i32) {
    %c0_i32 = arith.constant 0 : i32
    %c0_i32_0 = arith.constant 0 : i32
    return %arg0, %c0_i32 : i32, i32
  }
  func.func @transform_1(%arg0: i32) -> (i32, i32) {
    %c0_i32 = arith.constant 0 : i32
    %c0_i32_0 = arith.constant 0 : i32
    return %c0_i32, %arg0 : i32, i32
  }
  func.func @transform_2(%arg0: i32) -> (i32, i32) {
    %c0_i32 = arith.constant 0 : i32
    %c0_i32_0 = arith.constant 0 : i32
    %c0_i32_1 = arith.constant 0 : i32
    return %c0_i32, %c0_i32_0 : i32, i32
  }
  func.func @transform_3(%arg0: i32) -> (i32, i32) {
    %c0_i32 = arith.constant 0 : i32
    %c0_i32_0 = arith.constant 0 : i32
    %c0_i32_1 = arith.constant 0 : i32
    return %c0_i32, %c0_i32_0 : i32, i32
  }
  func.func @transform_4(%arg0: i32) -> (i32, i32) {
    %c0_i32 = arith.constant 0 : i32
    %c0_i32_0 = arith.constant 0 : i32
    %c0_i32_1 = arith.constant 0 : i32
    return %c0_i32, %c0_i32_0 : i32, i32
  }
  func.func @transform_5(%arg0: i32) -> (i32, i32) {
    %c0_i32 = arith.constant 0 : i32
    %c0_i32_0 = arith.constant 0 : i32
    %c0_i32_1 = arith.constant 0 : i32
    return %c0_i32, %c0_i32_0 : i32, i32
  }
  func.func @transform_6(%arg0: i32) -> (i32, i32) {
    %c0_i32 = arith.constant 0 : i32
    %c0_i32_0 = arith.constant 0 : i32
    %c0_i32_1 = arith.constant 0 : i32
    return %c0_i32, %c0_i32_0 : i32, i32
  }
  func.func @transform_7(%arg0: i32) -> (i32, i32) {
    %c0_i32 = arith.constant 0 : i32
    %c0_i32_0 = arith.constant 0 : i32
    %c0_i32_1 = arith.constant 0 : i32
    return %c0_i32, %c0_i32_0 : i32, i32
  }
  func.func @transform_8(%arg0: i32) -> (i32, i32) {
    %c0_i32 = arith.constant 0 : i32
    %c0_i32_0 = arith.constant 0 : i32
    %c0_i32_1 = arith.constant 0 : i32
    return %c0_i32, %c0_i32_0 : i32, i32
  }
  func.func @transform_9(%arg0: i32) -> (i32, i32) {
    %c0_i32 = arith.constant 0 : i32
    %c0_i32_0 = arith.constant 0 : i32
    %c0_i32_1 = arith.constant 0 : i32
    return %c0_i32, %c0_i32_0 : i32, i32
  }
  func.func @transform_10(%arg0: i32) -> (i32, i32) {
    %c0_i32 = arith.constant 0 : i32
    %c0_i32_0 = arith.constant 0 : i32
    %c0_i32_1 = arith.constant 0 : i32
    return %c0_i32, %c0_i32_0 : i32, i32
  }
  func.func @transform_11(%arg0: i32) -> (i32, i32) {
    %c0_i32 = arith.constant 0 : i32
    %c0_i32_0 = arith.constant 0 : i32
    %c0_i32_1 = arith.constant 0 : i32
    return %c0_i32, %c0_i32_0 : i32, i32
  }
  func.func @transform_12(%arg0: i32) -> (i32, i32) {
    %c0_i32 = arith.constant 0 : i32
    %c0_i32_0 = arith.constant 0 : i32
    %c0_i32_1 = arith.constant 0 : i32
    return %c0_i32, %c0_i32_0 : i32, i32
  }
}

</mosaic_0001>

<llo_original>
// kernel: gnpools_mlp_forward.2
$region0: #{gnpools_mlp_forward.2}
  #allocation0 [shape = 'u32[]', space=smem, size = 0x4, offset = 0x4, fixed_abs, tag = 'smem constant byte address 0x4 - core index']
  #allocation1 [shape = 'u32[72,128]{1,0:T(1,128)}', space=vmem, size = 0x9000, scoped, tag = 'internal scratch']
  %s0 = inlined_call_operand.vmem [shape: f32[32,128], index: 0, kind: input, shape index: {}]
  %s1 = inlined_call_operand.vmem [shape: f32[128,384], index: 1, kind: input, shape index: {}]
  %s2 = inlined_call_operand.vmem [shape: f32[1,384], index: 2, kind: input, shape index: {}]
  %s3 = inlined_call_operand.vmem [shape: f32[384,384], index: 3, kind: input, shape index: {}]
  %s4 = inlined_call_operand.vmem [shape: f32[1,384], index: 4, kind: input, shape index: {}]
  %s5 = inlined_call_operand.vmem [shape: f32[384,128], index: 5, kind: input, shape index: {}]
  %s6 = inlined_call_operand.vmem [shape: f32[1,128], index: 6, kind: input, shape index: {}]
  %s7 = inlined_call_operand.vmem [shape: f32[32,128], index: 7, kind: output, shape index: {}]
  %s8 = sld [smem:[#allocation0]]
  $region38: #{gnpools_mlp_forward.2} parent=0
    _
  %s10 = ssub.s32 1, %s8
  %s11 = scalar_select 0, %s10, %s8
  // Predicated region
  $region2: #{gnpools_mlp_forward.2} parent=0 // pred_check
    _
  $region3: #{gnpools_mlp_forward.2} parent=0 // pred_check_branch
    %13 = sbr.rel (0) target = $region5
  $region4: #{gnpools_mlp_forward.2} parent=0 // pred_region
    _
  $region5: #{gnpools_mlp_forward.2} parent=0 // pred_fallthru
    _
  // Predicated region
  $region6: #{gnpools_mlp_forward.2} parent=0 // pred_check
    _
  $region7: #{gnpools_mlp_forward.2} parent=0 // pred_check_branch
    %15 = sbr.rel (0) target = $region9
  $region8: #{gnpools_mlp_forward.2} parent=0 // pred_region
    _
  $region9: #{gnpools_mlp_forward.2} parent=0 // pred_fallthru
    _
  // Predicated region
  $region10: #{gnpools_mlp_forward.2} parent=0 // pred_check
    _
  $region11: #{gnpools_mlp_forward.2} parent=0 // pred_check_branch
    %17 = sbr.rel (0) target = $region13
  $region12: #{gnpools_mlp_forward.2} parent=0 // pred_region
    _
  $region13: #{gnpools_mlp_forward.2} parent=0 // pred_fallthru
    _
  // Predicated region
  $region14: #{gnpools_mlp_forward.2} parent=0 // pred_check
    _
  $region15: #{gnpools_mlp_forward.2} parent=0 // pred_check_branch
    %19 = sbr.rel (0) target = $region17
  $region16: #{gnpools_mlp_forward.2} parent=0 // pred_region
    _
  $region17: #{gnpools_mlp_forward.2} parent=0 // pred_fallthru
    _
  // Predicated region
  $region18: #{gnpools_mlp_forward.2} parent=0 // pred_check
    _
  $region19: #{gnpools_mlp_forward.2} parent=0 // pred_check_branch
    %21 = sbr.rel (0) target = $region21
  $region20: #{gnpools_mlp_forward.2} parent=0 // pred_region
    _
  $region21: #{gnpools_mlp_forward.2} parent=0 // pred_fallthru
    _
  // Predicated region
  $region22: #{gnpools_mlp_forward.2} parent=0 // pred_check
    _
  $region23: #{gnpools_mlp_forward.2} parent=0 // pred_check_branch
    %23 = sbr.rel (0) target = $region25
  $region24: #{gnpools_mlp_forward.2} parent=0 // pred_region
    _
  $region25: #{gnpools_mlp_forward.2} parent=0 // pred_fallthru
    _
  // Predicated region
  $region26: #{gnpools_mlp_forward.2} parent=0 // pred_check
    _
  $region27: #{gnpools_mlp_forward.2} parent=0 // pred_check_branch
    %25 = sbr.rel (0) target = $region29
  $region28: #{gnpools_mlp_forward.2} parent=0 // pred_region
    _
  $region29: #{gnpools_mlp_forward.2} parent=0 // pred_fallthru
    _
  %v26 = vld [vmem:[%s0] sm:$0xff]
  %v27 = vld [vmem:[%s0 + $0x8] sm:$0xff]
  %v28 = vld [vmem:[%s0 + $0x10] sm:$0xff]
  %v29 = vld [vmem:[%s0 + $0x18] sm:$0xff]
  %v30 = vld [vmem:[%s1] sm:$0xff]
  %v31 = vld [vmem:[%s1 + $0x8] sm:$0xff]
  %v32 = vld [vmem:[%s1 + $0x10] sm:$0xff]
  %v33 = vld [vmem:[%s1 + $0x18] sm:$0xff]
  %v34 = vld [vmem:[%s1 + $0x20] sm:$0xff]
  %v35 = vld [vmem:[%s1 + $0x28] sm:$0xff]
  %v36 = vld [vmem:[%s1 + $0x30] sm:$0xff]
  %v37 = vld [vmem:[%s1 + $0x38] sm:$0xff]
  %v38 = vld [vmem:[%s1 + $0x40] sm:$0xff]
  %v39 = vld [vmem:[%s1 + $0x48] sm:$0xff]
  %v40 = vld [vmem:[%s1 + $0x50] sm:$0xff]
  %v41 = vld [vmem:[%s1 + $0x58] sm:$0xff]
  %v42 = vld [vmem:[%s1 + $0x60] sm:$0xff]
  %v43 = vld [vmem:[%s1 + $0x68] sm:$0xff]
  %v44 = vld [vmem:[%s1 + $0x70] sm:$0xff]
  %v45 = vld [vmem:[%s1 + $0x78] sm:$0xff]
  %v46 = vld [vmem:[%s1 + $0x80] sm:$0xff]
  %v47 = vld [vmem:[%s1 + $0x88] sm:$0xff]
  %v48 = vld [vmem:[%s1 + $0x90] sm:$0xff]
  %v49 = vld [vmem:[%s1 + $0x98] sm:$0xff]
  %v50 = vld [vmem:[%s1 + $0xa0] sm:$0xff]
  %v51 = vld [vmem:[%s1 + $0xa8] sm:$0xff]
  %v52 = vld [vmem:[%s1 + $0xb0] sm:$0xff]
  %v53 = vld [vmem:[%s1 + $0xb8] sm:$0xff]
  %v54 = vld [vmem:[%s1 + $0xc0] sm:$0xff]
  %v55 = vld [vmem:[%s1 + $0xc8] sm:$0xff]
  %v56 = vld [vmem:[%s1 + $0xd0] sm:$0xff]
  %v57 = vld [vmem:[%s1 + $0xd8] sm:$0xff]
  %v58 = vld [vmem:[%s1 + $0xe0] sm:$0xff]
  %v59 = vld [vmem:[%s1 + $0xe8] sm:$0xff]
  %v60 = vld [vmem:[%s1 + $0xf0] sm:$0xff]
  %v61 = vld [vmem:[%s1 + $0xf8] sm:$0xff]
  %v62 = vld [vmem:[%s1 + $0x100] sm:$0xff]
  %v63 = vld [vmem:[%s1 + $0x108] sm:$0xff]
  %v64 = vld [vmem:[%s1 + $0x110] sm:$0xff]
  %v65 = vld [vmem:[%s1 + $0x118] sm:$0xff]
  %v66 = vld [vmem:[%s1 + $0x120] sm:$0xff]
  %v67 = vld [vmem:[%s1 + $0x128] sm:$0xff]
  %v68 = vld [vmem:[%s1 + $0x130] sm:$0xff]
  %v69 = vld [vmem:[%s1 + $0x138] sm:$0xff]
  %v70 = vld [vmem:[%s1 + $0x140] sm:$0xff]
  %v71 = vld [vmem:[%s1 + $0x148] sm:$0xff]
  %v72 = vld [vmem:[%s1 + $0x150] sm:$0xff]
  %v73 = vld [vmem:[%s1 + $0x158] sm:$0xff]
  %v74 = vld [vmem:[%s1 + $0x160] sm:$0xff]
  %v75 = vld [vmem:[%s1 + $0x168] sm:$0xff]
  %v76 = vld [vmem:[%s1 + $0x170] sm:$0xff]
  %v77 = vld [vmem:[%s1 + $0x178] sm:$0xff]
  %v78 = vld [vmem:[%s2] sm:$0x7]
  %v80 = vperm.slane %v78, 0
  %v81 = vperm.slane %v78, 1
  %v82 = vperm.slane %v78, 2
  %86 = vmatpush.msra.mxu0 %v75
  %87 = vmatpush.msra.mxu0 %v72
  %88 = vmatpush.msra.mxu0 %v69
  %89 = vmatpush.msra.mxu0 %v66
  %90 = vmatpush.msra.mxu0 %v63
  %91 = vmatpush.msra.mxu0 %v60
  %92 = vmatpush.msra.mxu0 %v57
  %93 = vmatpush.msra.mxu0 %v54
  %94 = vmatpush.msra.mxu0 %v51
  %95 = vmatpush.msra.mxu0 %v48
  %96 = vmatpush.msra.mxu0 %v45
  %97 = vmatpush.msra.mxu0 %v42
  %98 = vmatpush.msra.mxu0 %v39
  %99 = vmatpush.msra.mxu0 %v36
  %100 = vmatpush.msra.mxu0 %v33
  %101 = vmatpush.msra.mxu0 %v30
  %102 = vmatmul.f32.gmra.mxu0 %v26
  %v103 = vpop.f32.mrf.mxu0
  %v104 = vadd.f32 %v80, %v103
  %105 = vmatmul.f32.gmra.mxu0 %v27
  %v106 = vpop.f32.mrf.mxu0
  %v107 = vadd.f32 %v80, %v106
  %108 = vmatmul.f32.gmra.mxu0 %v28
  %v109 = vpop.f32.mrf.mxu0
  %v110 = vadd.f32 %v80, %v109
  %111 = vmatmul.f32.gmra.mxu0 %v29
  %v112 = vpop.f32.mrf.mxu0
  %v113 = vadd.f32 %v80, %v112
  %114 = vdwg.mxu0
  %115 = vmatpush.msra.mxu0 %v76
  %116 = vmatpush.msra.mxu0 %v73
  %117 = vmatpush.msra.mxu0 %v70
  %118 = vmatpush.msra.mxu0 %v67
  %119 = vmatpush.msra.mxu0 %v64
  %120 = vmatpush.msra.mxu0 %v61
  %121 = vmatpush.msra.mxu0 %v58
  %122 = vmatpush.msra.mxu0 %v55
  %123 = vmatpush.msra.mxu0 %v52
  %124 = vmatpush.msra.mxu0 %v49
  %125 = vmatpush.msra.mxu0 %v46
  %126 = vmatpush.msra.mxu0 %v43
  %127 = vmatpush.msra.mxu0 %v40
  %128 = vmatpush.msra.mxu0 %v37
  %129 = vmatpush.msra.mxu0 %v34
  %130 = vmatpush.msra.mxu0 %v31
  %131 = vmatmul.f32.gmra.mxu0 %v26
  %v132 = vpop.f32.mrf.mxu0
  %v133 = vadd.f32 %v81, %v132
  %134 = vmatmul.f32.gmra.mxu0 %v27
  %v135 = vpop.f32.mrf.mxu0
  %v136 = vadd.f32 %v81, %v135
  %137 = vmatmul.f32.gmra.mxu0 %v28
  %v138 = vpop.f32.mrf.mxu0
  %v139 = vadd.f32 %v81, %v138
  %140 = vmatmul.f32.gmra.mxu0 %v29
  %v141 = vpop.f32.mrf.mxu0
  %v142 = vadd.f32 %v81, %v141
  %143 = vdwg.mxu0
  %144 = vmatpush.msra.mxu0 %v77
  %145 = vmatpush.msra.mxu0 %v74
  %146 = vmatpush.msra.mxu0 %v71
  %147 = vmatpush.msra.mxu0 %v68
  %148 = vmatpush.msra.mxu0 %v65
  %149 = vmatpush.msra.mxu0 %v62
  %150 = vmatpush.msra.mxu0 %v59
  %151 = vmatpush.msra.mxu0 %v56
  %152 = vmatpush.msra.mxu0 %v53
  %153 = vmatpush.msra.mxu0 %v50
  %154 = vmatpush.msra.mxu0 %v47
  %155 = vmatpush.msra.mxu0 %v44
  %156 = vmatpush.msra.mxu0 %v41
  %157 = vmatpush.msra.mxu0 %v38
  %158 = vmatpush.msra.mxu0 %v35
  %159 = vmatpush.msra.mxu0 %v32
  %160 = vmatmul.f32.gmra.mxu0 %v26
  %v161 = vpop.f32.mrf.mxu0
  %v162 = vadd.f32 %v82, %v161
  %163 = vmatmul.f32.gmra.mxu0 %v27
  %v164 = vpop.f32.mrf.mxu0
  %v165 = vadd.f32 %v82, %v164
  %166 = vmatmul.f32.gmra.mxu0 %v28
  %v167 = vpop.f32.mrf.mxu0
  %v168 = vadd.f32 %v82, %v167
  %169 = vmatmul.f32.gmra.mxu0 %v29
  %v170 = vpop.f32.mrf.mxu0
  %v171 = vadd.f32 %v82, %v170
  %172 = vdwg.mxu0
  %v173 = vxor.u32 %v104, 2147483648
  %v174 = vxor.u32 %v133, 2147483648
  %v175 = vxor.u32 %v162, 2147483648
  %v176 = vxor.u32 %v107, 2147483648
  %v177 = vxor.u32 %v136, 2147483648
  %v178 = vxor.u32 %v165, 2147483648
  %v179 = vxor.u32 %v110, 2147483648
  %v180 = vxor.u32 %v139, 2147483648
  %v181 = vxor.u32 %v168, 2147483648
  %v182 = vxor.u32 %v113, 2147483648
  %v183 = vxor.u32 %v142, 2147483648
  %v184 = vxor.u32 %v171, 2147483648
  %v185 = vmul.f32 %v173, 1.442695
  %v186 = vpow.pop %v185
  %v187 = vmul.f32 %v174, 1.442695
  %v188 = vpow.pop %v187
  %v189 = vmul.f32 %v175, 1.442695
  %v190 = vpow.pop %v189
  %v191 = vmul.f32 %v176, 1.442695
  %v192 = vpow.pop %v191
  %v193 = vmul.f32 %v177, 1.442695
  %v194 = vpow.pop %v193
  %v195 = vmul.f32 %v178, 1.442695
  %v196 = vpow.pop %v195
  %v197 = vmul.f32 %v179, 1.442695
  %v198 = vpow.pop %v197
  %v199 = vmul.f32 %v180, 1.442695
  %v200 = vpow.pop %v199
  %v201 = vmul.f32 %v181, 1.442695
  %v202 = vpow.pop %v201
  %v203 = vmul.f32 %v182, 1.442695
  %v204 = vpow.pop %v203
  %v205 = vmul.f32 %v183, 1.442695
  %v206 = vpow.pop %v205
  %v207 = vmul.f32 %v184, 1.442695
  %v208 = vpow.pop %v207
  %v209 = vadd.f32 %v186, 1.0
  %v210 = vadd.f32 %v188, 1.0
  %v211 = vadd.f32 %v190, 1.0
  %v212 = vadd.f32 %v192, 1.0
  %v213 = vadd.f32 %v194, 1.0
  %v214 = vadd.f32 %v196, 1.0
  %v215 = vadd.f32 %v198, 1.0
  %v216 = vadd.f32 %v200, 1.0
  %v217 = vadd.f32 %v202, 1.0
  %v218 = vadd.f32 %v204, 1.0
  %v219 = vadd.f32 %v206, 1.0
  %v220 = vadd.f32 %v208, 1.0
  %v221 = vrcp.pop %v209
  %v222 = vmul.f32 %v209, %v221
  %v223 = vsub.f32 1.0, %v222
  %v224 = vmul.f32 %v221, %v223
  %v225 = vadd.f32 %v221, %v224
  %vm226 = vweird.f32 %v209
  %vm227 = vweird.f32 %v221
  %vm228 = vmor %vm226, %vm227
  %v229 = vsel %vm228, %v221, %v225
  %v230 = vand.u32 2147483647, %v209
  %vm231 = vcmp.eq.f32.partialorder %v230, 8.507059e+37
  %v232 = vand.u32 %v209, 2147483648
  %v233 = vor.u32 1.1754944e-38, %v232
  %v234 = vsel %vm231, %v233, %v229
  %v235 = vmul.f32 1.0, %v234
  %v236 = vrcp.pop %v210
  %v237 = vmul.f32 %v210, %v236
  %v238 = vsub.f32 1.0, %v237
  %v239 = vmul.f32 %v236, %v238
  %v240 = vadd.f32 %v236, %v239
  %vm241 = vweird.f32 %v210
  %vm242 = vweird.f32 %v236
  %vm243 = vmor %vm241, %vm242
  %v244 = vsel %vm243, %v236, %v240
  %v245 = vand.u32 2147483647, %v210
  %vm246 = vcmp.eq.f32.partialorder %v245, 8.507059e+37
  %v247 = vand.u32 %v210, 2147483648
  %v248 = vor.u32 1.1754944e-38, %v247
  %v249 = vsel %vm246, %v248, %v244
  %v250 = vmul.f32 1.0, %v249
  %v251 = vrcp.pop %v211
  %v252 = vmul.f32 %v211, %v251
  %v253 = vsub.f32 1.0, %v252
  %v254 = vmul.f32 %v251, %v253
  %v255 = vadd.f32 %v251, %v254
  %vm256 = vweird.f32 %v211
  %vm257 = vweird.f32 %v251
  %vm258 = vmor %vm256, %vm257
  %v259 = vsel %vm258, %v251, %v255
  %v260 = vand.u32 2147483647, %v211
  %vm261 = vcmp.eq.f32.partialorder %v260, 8.507059e+37
  %v262 = vand.u32 %v211, 2147483648
  %v263 = vor.u32 1.1754944e-38, %v262
  %v264 = vsel %vm261, %v263, %v259
  %v265 = vmul.f32 1.0, %v264
  %v266 = vrcp.pop %v212
  %v267 = vmul.f32 %v212, %v266
  %v268 = vsub.f32 1.0, %v267
  %v269 = vmul.f32 %v266, %v268
  %v270 = vadd.f32 %v266, %v269
  %vm271 = vweird.f32 %v212
  %vm272 = vweird.f32 %v266
  %vm273 = vmor %vm271, %vm272
  %v274 = vsel %vm273, %v266, %v270
  %v275 = vand.u32 2147483647, %v212
  %vm276 = vcmp.eq.f32.partialorder %v275, 8.507059e+37
  %v277 = vand.u32 %v212, 2147483648
  %v278 = vor.u32 1.1754944e-38, %v277
  %v279 = vsel %vm276, %v278, %v274
  %v280 = vmul.f32 1.0, %v279
  %v281 = vrcp.pop %v213
  %v282 = vmul.f32 %v213, %v281
  %v283 = vsub.f32 1.0, %v282
  %v284 = vmul.f32 %v281, %v283
  %v285 = vadd.f32 %v281, %v284
  %vm286 = vweird.f32 %v213
  %vm287 = vweird.f32 %v281
  %vm288 = vmor %vm286, %vm287
  %v289 = vsel %vm288, %v281, %v285
  %v290 = vand.u32 2147483647, %v213
  %vm291 = vcmp.eq.f32.partialorder %v290, 8.507059e+37
  %v292 = vand.u32 %v213, 2147483648
  %v293 = vor.u32 1.1754944e-38, %v292
  %v294 = vsel %vm291, %v293, %v289
  %v295 = vmul.f32 1.0, %v294
  %v296 = vrcp.pop %v214
  %v297 = vmul.f32 %v214, %v296
  %v298 = vsub.f32 1.0, %v297
  %v299 = vmul.f32 %v296, %v298
  %v300 = vadd.f32 %v296, %v299
  %vm301 = vweird.f32 %v214
  %vm302 = vweird.f32 %v296
  %vm303 = vmor %vm301, %vm302
  %v304 = vsel %vm303, %v296, %v300
  %v305 = vand.u32 2147483647, %v214
  %vm306 = vcmp.eq.f32.partialorder %v305, 8.507059e+37
  %v307 = vand.u32 %v214, 2147483648
  %v308 = vor.u32 1.1754944e-38, %v307
  %v309 = vsel %vm306, %v308, %v304
  %v310 = vmul.f32 1.0, %v309
  %v311 = vrcp.pop %v215
  %v312 = vmul.f32 %v215, %v311
  %v313 = vsub.f32 1.0, %v312
  %v314 = vmul.f32 %v311, %v313
  %v315 = vadd.f32 %v311, %v314
  %vm316 = vweird.f32 %v215
  %vm317 = vweird.f32 %v311
  %vm318 = vmor %vm316, %vm317
  %v319 = vsel %vm318, %v311, %v315
  %v320 = vand.u32 2147483647, %v215
  %vm321 = vcmp.eq.f32.partialorder %v320, 8.507059e+37
  %v322 = vand.u32 %v215, 2147483648
  %v323 = vor.u32 1.1754944e-38, %v322
  %v324 = vsel %vm321, %v323, %v319
  %v325 = vmul.f32 1.0, %v324
  %v326 = vrcp.pop %v216
  %v327 = vmul.f32 %v216, %v326
  %v328 = vsub.f32 1.0, %v327
  %v329 = vmul.f32 %v326, %v328
  %v330 = vadd.f32 %v326, %v329
  %vm331 = vweird.f32 %v216
  %vm332 = vweird.f32 %v326
  %vm333 = vmor %vm331, %vm332
  %v334 = vsel %vm333, %v326, %v330
  %v335 = vand.u32 2147483647, %v216
  %vm336 = vcmp.eq.f32.partialorder %v335, 8.507059e+37
  %v337 = vand.u32 %v216, 2147483648
  %v338 = vor.u32 1.1754944e-38, %v337
  %v339 = vsel %vm336, %v338, %v334
  %v340 = vmul.f32 1.0, %v339
  %v341 = vrcp.pop %v217
  %v342 = vmul.f32 %v217, %v341
  %v343 = vsub.f32 1.0, %v342
  %v344 = vmul.f32 %v341, %v343
  %v345 = vadd.f32 %v341, %v344
  %vm346 = vweird.f32 %v217
  %vm347 = vweird.f32 %v341
  %vm348 = vmor %vm346, %vm347
  %v349 = vsel %vm348, %v341, %v345
  %v350 = vand.u32 2147483647, %v217
  %vm351 = vcmp.eq.f32.partialorder %v350, 8.507059e+37
  %v352 = vand.u32 %v217, 2147483648
  %v353 = vor.u32 1.1754944e-38, %v352
  %v354 = vsel %vm351, %v353, %v349
  %v355 = vmul.f32 1.0, %v354
  %v356 = vrcp.pop %v218
  %v357 = vmul.f32 %v218, %v356
  %v358 = vsub.f32 1.0, %v357
  %v359 = vmul.f32 %v356, %v358
  %v360 = vadd.f32 %v356, %v359
  %vm361 = vweird.f32 %v218
  %vm362 = vweird.f32 %v356
  %vm363 = vmor %vm361, %vm362
  %v364 = vsel %vm363, %v356, %v360
  %v365 = vand.u32 2147483647, %v218
  %vm366 = vcmp.eq.f32.partialorder %v365, 8.507059e+37
  %v367 = vand.u32 %v218, 2147483648
  %v368 = vor.u32 1.1754944e-38, %v367
  %v369 = vsel %vm366, %v368, %v364
  %v370 = vmul.f32 1.0, %v369
  %v371 = vrcp.pop %v219
  %v372 = vmul.f32 %v219, %v371
  %v373 = vsub.f32 1.0, %v372
  %v374 = vmul.f32 %v371, %v373
  %v375 = vadd.f32 %v371, %v374
  %vm376 = vweird.f32 %v219
  %vm377 = vweird.f32 %v371
  %vm378 = vmor %vm376, %vm377
  %v379 = vsel %vm378, %v371, %v375
  %v380 = vand.u32 2147483647, %v219
  %vm381 = vcmp.eq.f32.partialorder %v380, 8.507059e+37
  %v382 = vand.u32 %v219, 2147483648
  %v383 = vor.u32 1.1754944e-38, %v382
  %v384 = vsel %vm381, %v383, %v379
  %v385 = vmul.f32 1.0, %v384
  %v386 = vrcp.pop %v220
  %v387 = vmul.f32 %v220, %v386
  %v388 = vsub.f32 1.0, %v387
  %v389 = vmul.f32 %v386, %v388
  %v390 = vadd.f32 %v386, %v389
  %vm391 = vweird.f32 %v220
  %vm392 = vweird.f32 %v386
  %vm393 = vmor %vm391, %vm392
  %v394 = vsel %vm393, %v386, %v390
  %v395 = vand.u32 2147483647, %v220
  %vm396 = vcmp.eq.f32.partialorder %v395, 8.507059e+37
  %v397 = vand.u32 %v220, 2147483648
  %v398 = vor.u32 1.1754944e-38, %v397
  %v399 = vsel %vm396, %v398, %v394
  %v400 = vmul.f32 1.0, %v399
  %v401 = vmul.f32 %v104, %v235
  %v402 = vmul.f32 %v133, %v250
  %v403 = vmul.f32 %v162, %v265
  %v404 = vmul.f32 %v107, %v280
  %v405 = vmul.f32 %v136, %v295
  %v406 = vmul.f32 %v165, %v310
  %v407 = vmul.f32 %v110, %v325
  %v408 = vmul.f32 %v139, %v340
  %v409 = vmul.f32 %v168, %v355
  %v410 = vmul.f32 %v113, %v370
  %v411 = vmul.f32 %v142, %v385
  %v412 = vmul.f32 %v171, %v400
  %v413 = vld [vmem:[%s3] sm:$0xff]
  %v414 = vld [vmem:[%s3 + $0x8] sm:$0xff]
  %v415 = vld [vmem:[%s3 + $0x10] sm:$0xff]
  %v416 = vld [vmem:[%s3 + $0x18] sm:$0xff]
  %v417 = vld [vmem:[%s3 + $0x20] sm:$0xff]
  %v418 = vld [vmem:[%s3 + $0x28] sm:$0xff]
  %v419 = vld [vmem:[%s3 + $0x30] sm:$0xff]
  %v420 = vld [vmem:[%s3 + $0x38] sm:$0xff]
  %v421 = vld [vmem:[%s3 + $0x40] sm:$0xff]
  %v422 = vld [vmem:[%s3 + $0x48] sm:$0xff]
  %v423 = vld [vmem:[%s3 + $0x50] sm:$0xff]
  %v424 = vld [vmem:[%s3 + $0x58] sm:$0xff]
  %v425 = vld [vmem:[%s3 + $0x60] sm:$0xff]
  %v426 = vld [vmem:[%s3 + $0x68] sm:$0xff]
  %v427 = vld [vmem:[%s3 + $0x70] sm:$0xff]
  %v428 = vld [vmem:[%s3 + $0x78] sm:$0xff]
  %v429 = vld [vmem:[%s3 + $0x80] sm:$0xff]
  %v430 = vld [vmem:[%s3 + $0x88] sm:$0xff]
  %v431 = vld [vmem:[%s3 + $0x90] sm:$0xff]
  %v432 = vld [vmem:[%s3 + $0x98] sm:$0xff]
  %v433 = vld [vmem:[%s3 + $0xa0] sm:$0xff]
  %v434 = vld [vmem:[%s3 + $0xa8] sm:$0xff]
  %v435 = vld [vmem:[%s3 + $0xb0] sm:$0xff]
  %v436 = vld [vmem:[%s3 + $0xb8] sm:$0xff]
  %v437 = vld [vmem:[%s3 + $0xc0] sm:$0xff]
  %v438 = vld [vmem:[%s3 + $0xc8] sm:$0xff]
  %v439 = vld [vmem:[%s3 + $0xd0] sm:$0xff]
  %v440 = vld [vmem:[%s3 + $0xd8] sm:$0xff]
  %v441 = vld [vmem:[%s3 + $0xe0] sm:$0xff]
  %v442 = vld [vmem:[%s3 + $0xe8] sm:$0xff]
  %v443 = vld [vmem:[%s3 + $0xf0] sm:$0xff]
  %v444 = vld [vmem:[%s3 + $0xf8] sm:$0xff]
  %v445 = vld [vmem:[%s3 + $0x100] sm:$0xff]
  %v446 = vld [vmem:[%s3 + $0x108] sm:$0xff]
  %v447 = vld [vmem:[%s3 + $0x110] sm:$0xff]
  %v448 = vld [vmem:[%s3 + $0x118] sm:$0xff]
  %v449 = vld [vmem:[%s3 + $0x120] sm:$0xff]
  %v450 = vld [vmem:[%s3 + $0x128] sm:$0xff]
  %v451 = vld [vmem:[%s3 + $0x130] sm:$0xff]
  %v452 = vld [vmem:[%s3 + $0x138] sm:$0xff]
  %v453 = vld [vmem:[%s3 + $0x140] sm:$0xff]
  %v454 = vld [vmem:[%s3 + $0x148] sm:$0xff]
  %v455 = vld [vmem:[%s3 + $0x150] sm:$0xff]
  %v456 = vld [vmem:[%s3 + $0x158] sm:$0xff]
  %v457 = vld [vmem:[%s3 + $0x160] sm:$0xff]
  %v458 = vld [vmem:[%s3 + $0x168] sm:$0xff]
  %v459 = vld [vmem:[%s3 + $0x170] sm:$0xff]
  %v460 = vld [vmem:[%s3 + $0x178] sm:$0xff]
  %v461 = vld [vmem:[%s3 + $0x180] sm:$0xff]
  %v462 = vld [vmem:[%s3 + $0x188] sm:$0xff]
  %v463 = vld [vmem:[%s3 + $0x190] sm:$0xff]
  %v464 = vld [vmem:[%s3 + $0x198] sm:$0xff]
  %v465 = vld [vmem:[%s3 + $0x1a0] sm:$0xff]
  %v466 = vld [vmem:[%s3 + $0x1a8] sm:$0xff]
  %v467 = vld [vmem:[%s3 + $0x1b0] sm:$0xff]
  %v468 = vld [vmem:[%s3 + $0x1b8] sm:$0xff]
  %v469 = vld [vmem:[%s3 + $0x1c0] sm:$0xff]
  %v470 = vld [vmem:[%s3 + $0x1c8] sm:$0xff]
  %v471 = vld [vmem:[%s3 + $0x1d0] sm:$0xff]
  %v472 = vld [vmem:[%s3 + $0x1d8] sm:$0xff]
  %v473 = vld [vmem:[%s3 + $0x1e0] sm:$0xff]
  %v474 = vld [vmem:[%s3 + $0x1e8] sm:$0xff]
  %v475 = vld [vmem:[%s3 + $0x1f0] sm:$0xff]
  %v476 = vld [vmem:[%s3 + $0x1f8] sm:$0xff]
  %v477 = vld [vmem:[%s3 + $0x200] sm:$0xff]
  %v478 = vld [vmem:[%s3 + $0x208] sm:$0xff]
  %v479 = vld [vmem:[%s3 + $0x210] sm:$0xff]
  %v480 = vld [vmem:[%s3 + $0x218] sm:$0xff]
  %v481 = vld [vmem:[%s3 + $0x220] sm:$0xff]
  %v482 = vld [vmem:[%s3 + $0x228] sm:$0xff]
  %v483 = vld [vmem:[%s3 + $0x230] sm:$0xff]
  %v484 = vld [vmem:[%s3 + $0x238] sm:$0xff]
  %v485 = vld [vmem:[%s3 + $0x240] sm:$0xff]
  %v486 = vld [vmem:[%s3 + $0x248] sm:$0xff]
  %v487 = vld [vmem:[%s3 + $0x250] sm:$0xff]
  %v488 = vld [vmem:[%s3 + $0x258] sm:$0xff]
  %v489 = vld [vmem:[%s3 + $0x260] sm:$0xff]
  %v490 = vld [vmem:[%s3 + $0x268] sm:$0xff]
  %v491 = vld [vmem:[%s3 + $0x270] sm:$0xff]
  %v492 = vld [vmem:[%s3 + $0x278] sm:$0xff]
  %v493 = vld [vmem:[%s3 + $0x280] sm:$0xff]
  %v494 = vld [vmem:[%s3 + $0x288] sm:$0xff]
  %v495 = vld [vmem:[%s3 + $0x290] sm:$0xff]
  %v496 = vld [vmem:[%s3 + $0x298] sm:$0xff]
  %v497 = vld [vmem:[%s3 + $0x2a0] sm:$0xff]
  %v498 = vld [vmem:[%s3 + $0x2a8] sm:$0xff]
  %v499 = vld [vmem:[%s3 + $0x2b0] sm:$0xff]
  %v500 = vld [vmem:[%s3 + $0x2b8] sm:$0xff]
  %v501 = vld [vmem:[%s3 + $0x2c0] sm:$0xff]
  %v502 = vld [vmem:[%s3 + $0x2c8] sm:$0xff]
  %v503 = vld [vmem:[%s3 + $0x2d0] sm:$0xff]
  %v504 = vld [vmem:[%s3 + $0x2d8] sm:$0xff]
  %v505 = vld [vmem:[%s3 + $0x2e0] sm:$0xff]
  %v506 = vld [vmem:[%s3 + $0x2e8] sm:$0xff]
  %v507 = vld [vmem:[%s3 + $0x2f0] sm:$0xff]
  %v508 = vld [vmem:[%s3 + $0x2f8] sm:$0xff]
  %v509 = vld [vmem:[%s3 + $0x300] sm:$0xff]
  %v510 = vld [vmem:[%s3 + $0x308] sm:$0xff]
  %v511 = vld [vmem:[%s3 + $0x310] sm:$0xff]
  %v512 = vld [vmem:[%s3 + $0x318] sm:$0xff]
  %v513 = vld [vmem:[%s3 + $0x320] sm:$0xff]
  %v514 = vld [vmem:[%s3 + $0x328] sm:$0xff]
  %v515 = vld [vmem:[%s3 + $0x330] sm:$0xff]
  %v516 = vld [vmem:[%s3 + $0x338] sm:$0xff]
  %v517 = vld [vmem:[%s3 + $0x340] sm:$0xff]
  %v518 = vld [vmem:[%s3 + $0x348] sm:$0xff]
  %v519 = vld [vmem:[%s3 + $0x350] sm:$0xff]
  %v520 = vld [vmem:[%s3 + $0x358] sm:$0xff]
  %v521 = vld [vmem:[%s3 + $0x360] sm:$0xff]
  %v522 = vld [vmem:[%s3 + $0x368] sm:$0xff]
  %v523 = vld [vmem:[%s3 + $0x370] sm:$0xff]
  %v524 = vld [vmem:[%s3 + $0x378] sm:$0xff]
  %v525 = vld [vmem:[%s3 + $0x380] sm:$0xff]
  %v526 = vld [vmem:[%s3 + $0x388] sm:$0xff]
  %v527 = vld [vmem:[%s3 + $0x390] sm:$0xff]
  %v528 = vld [vmem:[%s3 + $0x398] sm:$0xff]
  %v529 = vld [vmem:[%s3 + $0x3a0] sm:$0xff]
  %v530 = vld [vmem:[%s3 + $0x3a8] sm:$0xff]
  %v531 = vld [vmem:[%s3 + $0x3b0] sm:$0xff]
  %v532 = vld [vmem:[%s3 + $0x3b8] sm:$0xff]
  %v533 = vld [vmem:[%s3 + $0x3c0] sm:$0xff]
  %v534 = vld [vmem:[%s3 + $0x3c8] sm:$0xff]
  %v535 = vld [vmem:[%s3 + $0x3d0] sm:$0xff]
  %v536 = vld [vmem:[%s3 + $0x3d8] sm:$0xff]
  %v537 = vld [vmem:[%s3 + $0x3e0] sm:$0xff]
  %v538 = vld [vmem:[%s3 + $0x3e8] sm:$0xff]
  %v539 = vld [vmem:[%s3 + $0x3f0] sm:$0xff]
  %v540 = vld [vmem:[%s3 + $0x3f8] sm:$0xff]
  %v541 = vld [vmem:[%s3 + $0x400] sm:$0xff]
  %v542 = vld [vmem:[%s3 + $0x408] sm:$0xff]
  %v543 = vld [vmem:[%s3 + $0x410] sm:$0xff]
  %v544 = vld [vmem:[%s3 + $0x418] sm:$0xff]
  %v545 = vld [vmem:[%s3 + $0x420] sm:$0xff]
  %v546 = vld [vmem:[%s3 + $0x428] sm:$0xff]
  %v547 = vld [vmem:[%s3 + $0x430] sm:$0xff]
  %v548 = vld [vmem:[%s3 + $0x438] sm:$0xff]
  %v549 = vld [vmem:[%s3 + $0x440] sm:$0xff]
  %v550 = vld [vmem:[%s3 + $0x448] sm:$0xff]
  %v551 = vld [vmem:[%s3 + $0x450] sm:$0xff]
  %v552 = vld [vmem:[%s3 + $0x458] sm:$0xff]
  %v553 = vld [vmem:[%s3 + $0x460] sm:$0xff]
  %v554 = vld [vmem:[%s3 + $0x468] sm:$0xff]
  %v555 = vld [vmem:[%s3 + $0x470] sm:$0xff]
  %v556 = vld [vmem:[%s3 + $0x478] sm:$0xff]
  %v557 = vld [vmem:[%s4] sm:$0x7]
  %v559 = vperm.slane %v557, 0
  %v560 = vperm.slane %v557, 1
  %v561 = vperm.slane %v557, 2
  %565 = vmatpush.msra.mxu0 %v458
  %566 = vmatpush.msra.mxu0 %v455
  %567 = vmatpush.msra.mxu0 %v452
  %568 = vmatpush.msra.mxu0 %v449
  %569 = vmatpush.msra.mxu0 %v446
  %570 = vmatpush.msra.mxu0 %v443
  %571 = vmatpush.msra.mxu0 %v440
  %572 = vmatpush.msra.mxu0 %v437
  %573 = vmatpush.msra.mxu0 %v434
  %574 = vmatpush.msra.mxu0 %v431
  %575 = vmatpush.msra.mxu0 %v428
  %576 = vmatpush.msra.mxu0 %v425
  %577 = vmatpush.msra.mxu0 %v422
  %578 = vmatpush.msra.mxu0 %v419
  %579 = vmatpush.msra.mxu0 %v416
  %580 = vmatpush.msra.mxu0 %v413
  %581 = vmatmul.f32.gmra.mxu0 %v401
  %v582 = vpop.f32.mrf.mxu0
  %v583 = vadd.f32 %v559, %v582
  %584 = vmatmul.f32.gmra.mxu0 %v404
  %v585 = vpop.f32.mrf.mxu0
  %v586 = vadd.f32 %v559, %v585
  %587 = vmatmul.f32.gmra.mxu0 %v407
  %v588 = vpop.f32.mrf.mxu0
  %v589 = vadd.f32 %v559, %v588
  %590 = vmatmul.f32.gmra.mxu0 %v410
  %v591 = vpop.f32.mrf.mxu0
  %v592 = vadd.f32 %v559, %v591
  %593 = vdwg.mxu0
  %594 = vmatpush.msra.mxu0 %v506
  %595 = vmatpush.msra.mxu0 %v503
  %596 = vmatpush.msra.mxu0 %v500
  %597 = vmatpush.msra.mxu0 %v497
  %598 = vmatpush.msra.mxu0 %v494
  %599 = vmatpush.msra.mxu0 %v491
  %600 = vmatpush.msra.mxu0 %v488
  %601 = vmatpush.msra.mxu0 %v485
  %602 = vmatpush.msra.mxu0 %v482
  %603 = vmatpush.msra.mxu0 %v479
  %604 = vmatpush.msra.mxu0 %v476
  %605 = vmatpush.msra.mxu0 %v473
  %606 = vmatpush.msra.mxu0 %v470
  %607 = vmatpush.msra.mxu0 %v467
  %608 = vmatpush.msra.mxu0 %v464
  %609 = vmatpush.msra.mxu0 %v461
  %610 = vmatmul.f32.gmra.mxu0 %v402
  %v611 = vpop.f32.mrf.mxu0
  %v612 = vadd.f32 %v583, %v611
  %613 = vmatmul.f32.gmra.mxu0 %v405
  %v614 = vpop.f32.mrf.mxu0
  %v615 = vadd.f32 %v586, %v614
  %616 = vmatmul.f32.gmra.mxu0 %v408
  %v617 = vpop.f32.mrf.mxu0
  %v618 = vadd.f32 %v589, %v617
  %619 = vmatmul.f32.gmra.mxu0 %v411
  %v620 = vpop.f32.mrf.mxu0
  %v621 = vadd.f32 %v592, %v620
  %622 = vdwg.mxu0
  %623 = vmatpush.msra.mxu0 %v554
  %624 = vmatpush.msra.mxu0 %v551
  %625 = vmatpush.msra.mxu0 %v548
  %626 = vmatpush.msra.mxu0 %v545
  %627 = vmatpush.msra.mxu0 %v542
  %628 = vmatpush.msra.mxu0 %v539
  %629 = vmatpush.msra.mxu0 %v536
  %630 = vmatpush.msra.mxu0 %v533
  %631 = vmatpush.msra.mxu0 %v530
  %632 = vmatpush.msra.mxu0 %v527
  %633 = vmatpush.msra.mxu0 %v524
  %634 = vmatpush.msra.mxu0 %v521
  %635 = vmatpush.msra.mxu0 %v518
  %636 = vmatpush.msra.mxu0 %v515
  %637 = vmatpush.msra.mxu0 %v512
  %638 = vmatpush.msra.mxu0 %v509
  %639 = vmatmul.f32.gmra.mxu0 %v403
  %v640 = vpop.f32.mrf.mxu0
  %v641 = vadd.f32 %v612, %v640
  %642 = vmatmul.f32.gmra.mxu0 %v406
  %v643 = vpop.f32.mrf.mxu0
  %v644 = vadd.f32 %v615, %v643
  %645 = vmatmul.f32.gmra.mxu0 %v409
  %v646 = vpop.f32.mrf.mxu0
  %v647 = vadd.f32 %v618, %v646
  %648 = vmatmul.f32.gmra.mxu0 %v412
  %v649 = vpop.f32.mrf.mxu0
  %v650 = vadd.f32 %v621, %v649
  %651 = vdwg.mxu0
  %652 = vmatpush.msra.mxu0 %v459
  %653 = vmatpush.msra.mxu0 %v456
  %654 = vmatpush.msra.mxu0 %v453
  %655 = vmatpush.msra.mxu0 %v450
  %656 = vmatpush.msra.mxu0 %v447
  %657 = vmatpush.msra.mxu0 %v444
  %658 = vmatpush.msra.mxu0 %v441
  %659 = vmatpush.msra.mxu0 %v438
  %660 = vmatpush.msra.mxu0 %v435
  %661 = vmatpush.msra.mxu0 %v432
  %662 = vmatpush.msra.mxu0 %v429
  %663 = vmatpush.msra.mxu0 %v426
  %664 = vmatpush.msra.mxu0 %v423
  %665 = vmatpush.msra.mxu0 %v420
  %666 = vmatpush.msra.mxu0 %v417
  %667 = vmatpush.msra.mxu0 %v414
  %668 = vmatmul.f32.gmra.mxu0 %v401
  %v669 = vpop.f32.mrf.mxu0
  %v670 = vadd.f32 %v560, %v669
  %671 = vmatmul.f32.gmra.mxu0 %v404
  %v672 = vpop.f32.mrf.mxu0
  %v673 = vadd.f32 %v560, %v672
  %674 = vmatmul.f32.gmra.mxu0 %v407
  %v675 = vpop.f32.mrf.mxu0
  %v676 = vadd.f32 %v560, %v675
  %677 = vmatmul.f32.gmra.mxu0 %v410
  %v678 = vpop.f32.mrf.mxu0
  %v679 = vadd.f32 %v560, %v678
  %680 = vdwg.mxu0
  %681 = vmatpush.msra.mxu0 %v507
  %682 = vmatpush.msra.mxu0 %v504
  %683 = vmatpush.msra.mxu0 %v501
  %684 = vmatpush.msra.mxu0 %v498
  %685 = vmatpush.msra.mxu0 %v495
  %686 = vmatpush.msra.mxu0 %v492
  %687 = vmatpush.msra.mxu0 %v489
  %688 = vmatpush.msra.mxu0 %v486
  %689 = vmatpush.msra.mxu0 %v483
  %690 = vmatpush.msra.mxu0 %v480
  %691 = vmatpush.msra.mxu0 %v477
  %692 = vmatpush.msra.mxu0 %v474
  %693 = vmatpush.msra.mxu0 %v471
  %694 = vmatpush.msra.mxu0 %v468
  %695 = vmatpush.msra.mxu0 %v465
  %696 = vmatpush.msra.mxu0 %v462
  %697 = vmatmul.f32.gmra.mxu0 %v402
  %v698 = vpop.f32.mrf.mxu0
  %v699 = vadd.f32 %v670, %v698
  %700 = vmatmul.f32.gmra.mxu0 %v405
  %v701 = vpop.f32.mrf.mxu0
  %v702 = vadd.f32 %v673, %v701
  %703 = vmatmul.f32.gmra.mxu0 %v408
  %v704 = vpop.f32.mrf.mxu0
  %v705 = vadd.f32 %v676, %v704
  %706 = vmatmul.f32.gmra.mxu0 %v411
  %v707 = vpop.f32.mrf.mxu0
  %v708 = vadd.f32 %v679, %v707
  %709 = vdwg.mxu0
  %710 = vmatpush.msra.mxu0 %v555
  %711 = vmatpush.msra.mxu0 %v552
  %712 = vmatpush.msra.mxu0 %v549
  %713 = vmatpush.msra.mxu0 %v546
  %714 = vmatpush.msra.mxu0 %v543
  %715 = vmatpush.msra.mxu0 %v540
  %716 = vmatpush.msra.mxu0 %v537
  %717 = vmatpush.msra.mxu0 %v534
  %718 = vmatpush.msra.mxu0 %v531
  %719 = vmatpush.msra.mxu0 %v528
  %720 = vmatpush.msra.mxu0 %v525
  %721 = vmatpush.msra.mxu0 %v522
  %722 = vmatpush.msra.mxu0 %v519
  %723 = vmatpush.msra.mxu0 %v516
  %724 = vmatpush.msra.mxu0 %v513
  %725 = vmatpush.msra.mxu0 %v510
  %726 = vmatmul.f32.gmra.mxu0 %v403
  %v727 = vpop.f32.mrf.mxu0
  %v728 = vadd.f32 %v699, %v727
  %729 = vmatmul.f32.gmra.mxu0 %v406
  %v730 = vpop.f32.mrf.mxu0
  %v731 = vadd.f32 %v702, %v730
  %732 = vmatmul.f32.gmra.mxu0 %v409
  %v733 = vpop.f32.mrf.mxu0
  %v734 = vadd.f32 %v705, %v733
  %735 = vmatmul.f32.gmra.mxu0 %v412
  %v736 = vpop.f32.mrf.mxu0
  %v737 = vadd.f32 %v708, %v736
  %738 = vdwg.mxu0
  %739 = vmatpush.msra.mxu0 %v460
  %740 = vmatpush.msra.mxu0 %v457
  %741 = vmatpush.msra.mxu0 %v454
  %742 = vmatpush.msra.mxu0 %v451
  %743 = vmatpush.msra.mxu0 %v448
  %744 = vmatpush.msra.mxu0 %v445
  %745 = vmatpush.msra.mxu0 %v442
  %746 = vmatpush.msra.mxu0 %v439
  %747 = vmatpush.msra.mxu0 %v436
  %748 = vmatpush.msra.mxu0 %v433
  %749 = vmatpush.msra.mxu0 %v430
  %750 = vmatpush.msra.mxu0 %v427
  %751 = vmatpush.msra.mxu0 %v424
  %752 = vmatpush.msra.mxu0 %v421
  %753 = vmatpush.msra.mxu0 %v418
  %754 = vmatpush.msra.mxu0 %v415
  %755 = vmatmul.f32.gmra.mxu0 %v401
  %v756 = vpop.f32.mrf.mxu0
  %v757 = vadd.f32 %v561, %v756
  %758 = vmatmul.f32.gmra.mxu0 %v404
  %v759 = vpop.f32.mrf.mxu0
  %v760 = vadd.f32 %v561, %v759
  %761 = vmatmul.f32.gmra.mxu0 %v407
  %v762 = vpop.f32.mrf.mxu0
  %v763 = vadd.f32 %v561, %v762
  %764 = vmatmul.f32.gmra.mxu0 %v410
  %v765 = vpop.f32.mrf.mxu0
  %v766 = vadd.f32 %v561, %v765
  %767 = vdwg.mxu0
  %768 = vmatpush.msra.mxu0 %v508
  %769 = vmatpush.msra.mxu0 %v505
  %770 = vmatpush.msra.mxu0 %v502
  %771 = vmatpush.msra.mxu0 %v499
  %772 = vmatpush.msra.mxu0 %v496
  %773 = vmatpush.msra.mxu0 %v493
  %774 = vmatpush.msra.mxu0 %v490
  %775 = vmatpush.msra.mxu0 %v487
  %776 = vmatpush.msra.mxu0 %v484
  %777 = vmatpush.msra.mxu0 %v481
  %778 = vmatpush.msra.mxu0 %v478
  %779 = vmatpush.msra.mxu0 %v475
  %780 = vmatpush.msra.mxu0 %v472
  %781 = vmatpush.msra.mxu0 %v469
  %782 = vmatpush.msra.mxu0 %v466
  %783 = vmatpush.msra.mxu0 %v463
  %784 = vmatmul.f32.gmra.mxu0 %v402
  %v785 = vpop.f32.mrf.mxu0
  %v786 = vadd.f32 %v757, %v785
  %787 = vmatmul.f32.gmra.mxu0 %v405
  %v788 = vpop.f32.mrf.mxu0
  %v789 = vadd.f32 %v760, %v788
  %790 = vmatmul.f32.gmra.mxu0 %v408
  %v791 = vpop.f32.mrf.mxu0
  %v792 = vadd.f32 %v763, %v791
  %793 = vmatmul.f32.gmra.mxu0 %v411
  %v794 = vpop.f32.mrf.mxu0
  %v795 = vadd.f32 %v766, %v794
  %796 = vdwg.mxu0
  %797 = vmatpush.msra.mxu0 %v556
  %798 = vmatpush.msra.mxu0 %v553
  %799 = vmatpush.msra.mxu0 %v550
  %800 = vmatpush.msra.mxu0 %v547
  %801 = vmatpush.msra.mxu0 %v544
  %802 = vmatpush.msra.mxu0 %v541
  %803 = vmatpush.msra.mxu0 %v538
  %804 = vmatpush.msra.mxu0 %v535
  %805 = vmatpush.msra.mxu0 %v532
  %806 = vmatpush.msra.mxu0 %v529
  %807 = vmatpush.msra.mxu0 %v526
  %808 = vmatpush.msra.mxu0 %v523
  %809 = vmatpush.msra.mxu0 %v520
  %810 = vmatpush.msra.mxu0 %v517
  %811 = vmatpush.msra.mxu0 %v514
  %812 = vmatpush.msra.mxu0 %v511
  %813 = vmatmul.f32.gmra.mxu0 %v403
  %v814 = vpop.f32.mrf.mxu0
  %v815 = vadd.f32 %v786, %v814
  %816 = vmatmul.f32.gmra.mxu0 %v406
  %v817 = vpop.f32.mrf.mxu0
  %v818 = vadd.f32 %v789, %v817
  %819 = vmatmul.f32.gmra.mxu0 %v409
  %v820 = vpop.f32.mrf.mxu0
  %v821 = vadd.f32 %v792, %v820
  %822 = vmatmul.f32.gmra.mxu0 %v412
  %v823 = vpop.f32.mrf.mxu0
  %v824 = vadd.f32 %v795, %v823
  %825 = vdwg.mxu0
  %v826 = vxor.u32 %v641, 2147483648
  %v827 = vxor.u32 %v728, 2147483648
  %v828 = vxor.u32 %v815, 2147483648
  %v829 = vxor.u32 %v644, 2147483648
  %v830 = vxor.u32 %v731, 2147483648
  %v831 = vxor.u32 %v818, 2147483648
  %v832 = vxor.u32 %v647, 2147483648
  %v833 = vxor.u32 %v734, 2147483648
  %v834 = vxor.u32 %v821, 2147483648
  %v835 = vxor.u32 %v650, 2147483648
  %v836 = vxor.u32 %v737, 2147483648
  %v837 = vxor.u32 %v824, 2147483648
  %v838 = vmul.f32 %v826, 1.442695
  %v839 = vpow.pop %v838
  %v840 = vmul.f32 %v827, 1.442695
  %v841 = vpow.pop %v840
  %v842 = vmul.f32 %v828, 1.442695
  %v843 = vpow.pop %v842
  %v844 = vmul.f32 %v829, 1.442695
  %v845 = vpow.pop %v844
  %v846 = vmul.f32 %v830, 1.442695
  %v847 = vpow.pop %v846
  %v848 = vmul.f32 %v831, 1.442695
  %v849 = vpow.pop %v848
  %v850 = vmul.f32 %v832, 1.442695
  %v851 = vpow.pop %v850
  %v852 = vmul.f32 %v833, 1.442695
  %v853 = vpow.pop %v852
  %v854 = vmul.f32 %v834, 1.442695
  %v855 = vpow.pop %v854
  %v856 = vmul.f32 %v835, 1.442695
  %v857 = vpow.pop %v856
  %v858 = vmul.f32 %v836, 1.442695
  %v859 = vpow.pop %v858
  %v860 = vmul.f32 %v837, 1.442695
  %v861 = vpow.pop %v860
  %v862 = vadd.f32 %v839, 1.0
  %v863 = vadd.f32 %v841, 1.0
  %v864 = vadd.f32 %v843, 1.0
  %v865 = vadd.f32 %v845, 1.0
  %v866 = vadd.f32 %v847, 1.0
  %v867 = vadd.f32 %v849, 1.0
  %v868 = vadd.f32 %v851, 1.0
  %v869 = vadd.f32 %v853, 1.0
  %v870 = vadd.f32 %v855, 1.0
  %v871 = vadd.f32 %v857, 1.0
  %v872 = vadd.f32 %v859, 1.0
  %v873 = vadd.f32 %v861, 1.0
  %v874 = vrcp.pop %v862
  %v875 = vmul.f32 %v862, %v874
  %v876 = vsub.f32 1.0, %v875
  %v877 = vmul.f32 %v874, %v876
  %v878 = vadd.f32 %v874, %v877
  %vm879 = vweird.f32 %v862
  %vm880 = vweird.f32 %v874
  %vm881 = vmor %vm879, %vm880
  %v882 = vsel %vm881, %v874, %v878
  %v883 = vand.u32 2147483647, %v862
  %vm884 = vcmp.eq.f32.partialorder %v883, 8.507059e+37
  %v885 = vand.u32 %v862, 2147483648
  %v886 = vor.u32 1.1754944e-38, %v885
  %v887 = vsel %vm884, %v886, %v882
  %v888 = vmul.f32 1.0, %v887
  %v889 = vrcp.pop %v863
  %v890 = vmul.f32 %v863, %v889
  %v891 = vsub.f32 1.0, %v890
  %v892 = vmul.f32 %v889, %v891
  %v893 = vadd.f32 %v889, %v892
  %vm894 = vweird.f32 %v863
  %vm895 = vweird.f32 %v889
  %vm896 = vmor %vm894, %vm895
  %v897 = vsel %vm896, %v889, %v893
  %v898 = vand.u32 2147483647, %v863
  %vm899 = vcmp.eq.f32.partialorder %v898, 8.507059e+37
  %v900 = vand.u32 %v863, 2147483648
  %v901 = vor.u32 1.1754944e-38, %v900
  %v902 = vsel %vm899, %v901, %v897
  %v903 = vmul.f32 1.0, %v902
  %v904 = vrcp.pop %v864
  %v905 = vmul.f32 %v864, %v904
  %v906 = vsub.f32 1.0, %v905
  %v907 = vmul.f32 %v904, %v906
  %v908 = vadd.f32 %v904, %v907
  %vm909 = vweird.f32 %v864
  %vm910 = vweird.f32 %v904
  %vm911 = vmor %vm909, %vm910
  %v912 = vsel %vm911, %v904, %v908
  %v913 = vand.u32 2147483647, %v864
  %vm914 = vcmp.eq.f32.partialorder %v913, 8.507059e+37
  %v915 = vand.u32 %v864, 2147483648
  %v916 = vor.u32 1.1754944e-38, %v915
  %v917 = vsel %vm914, %v916, %v912
  %v918 = vmul.f32 1.0, %v917
  %v919 = vrcp.pop %v865
  %v920 = vmul.f32 %v865, %v919
  %v921 = vsub.f32 1.0, %v920
  %v922 = vmul.f32 %v919, %v921
  %v923 = vadd.f32 %v919, %v922
  %vm924 = vweird.f32 %v865
  %vm925 = vweird.f32 %v919
  %vm926 = vmor %vm924, %vm925
  %v927 = vsel %vm926, %v919, %v923
  %v928 = vand.u32 2147483647, %v865
  %vm929 = vcmp.eq.f32.partialorder %v928, 8.507059e+37
  %v930 = vand.u32 %v865, 2147483648
  %v931 = vor.u32 1.1754944e-38, %v930
  %v932 = vsel %vm929, %v931, %v927
  %v933 = vmul.f32 1.0, %v932
  %v934 = vrcp.pop %v866
  %v935 = vmul.f32 %v866, %v934
  %v936 = vsub.f32 1.0, %v935
  %v937 = vmul.f32 %v934, %v936
  %v938 = vadd.f32 %v934, %v937
  %vm939 = vweird.f32 %v866
  %vm940 = vweird.f32 %v934
  %vm941 = vmor %vm939, %vm940
  %v942 = vsel %vm941, %v934, %v938
  %v943 = vand.u32 2147483647, %v866
  %vm944 = vcmp.eq.f32.partialorder %v943, 8.507059e+37
  %v945 = vand.u32 %v866, 2147483648
  %v946 = vor.u32 1.1754944e-38, %v945
  %v947 = vsel %vm944, %v946, %v942
  %v948 = vmul.f32 1.0, %v947
  %v949 = vrcp.pop %v867
  %v950 = vmul.f32 %v867, %v949
  %v951 = vsub.f32 1.0, %v950
  %v952 = vmul.f32 %v949, %v951
  %v953 = vadd.f32 %v949, %v952
  %vm954 = vweird.f32 %v867
  %vm955 = vweird.f32 %v949
  %vm956 = vmor %vm954, %vm955
  %v957 = vsel %vm956, %v949, %v953
  %v958 = vand.u32 2147483647, %v867
  %vm959 = vcmp.eq.f32.partialorder %v958, 8.507059e+37
  %v960 = vand.u32 %v867, 2147483648
  %v961 = vor.u32 1.1754944e-38, %v960
  %v962 = vsel %vm959, %v961, %v957
  %v963 = vmul.f32 1.0, %v962
  %v964 = vrcp.pop %v868
  %v965 = vmul.f32 %v868, %v964
  %v966 = vsub.f32 1.0, %v965
  %v967 = vmul.f32 %v964, %v966
  %v968 = vadd.f32 %v964, %v967
  %vm969 = vweird.f32 %v868
  %vm970 = vweird.f32 %v964
  %vm971 = vmor %vm969, %vm970
  %v972 = vsel %vm971, %v964, %v968
  %v973 = vand.u32 2147483647, %v868
  %vm974 = vcmp.eq.f32.partialorder %v973, 8.507059e+37
  %v975 = vand.u32 %v868, 2147483648
  %v976 = vor.u32 1.1754944e-38, %v975
  %v977 = vsel %vm974, %v976, %v972
  %v978 = vmul.f32 1.0, %v977
  %v979 = vrcp.pop %v869
  %v980 = vmul.f32 %v869, %v979
  %v981 = vsub.f32 1.0, %v980
  %v982 = vmul.f32 %v979, %v981
  %v983 = vadd.f32 %v979, %v982
  %vm984 = vweird.f32 %v869
  %vm985 = vweird.f32 %v979
  %vm986 = vmor %vm984, %vm985
  %v987 = vsel %vm986, %v979, %v983
  %v988 = vand.u32 2147483647, %v869
  %vm989 = vcmp.eq.f32.partialorder %v988, 8.507059e+37
  %v990 = vand.u32 %v869, 2147483648
  %v991 = vor.u32 1.1754944e-38, %v990
  %v992 = vsel %vm989, %v991, %v987
  %v993 = vmul.f32 1.0, %v992
  %v994 = vrcp.pop %v870
  %v995 = vmul.f32 %v870, %v994
  %v996 = vsub.f32 1.0, %v995
  %v997 = vmul.f32 %v994, %v996
  %v998 = vadd.f32 %v994, %v997
  %vm999 = vweird.f32 %v870
  %vm1000 = vweird.f32 %v994
  %vm1001 = vmor %vm999, %vm1000
  %v1002 = vsel %vm1001, %v994, %v998
  %v1003 = vand.u32 2147483647, %v870
  %vm1004 = vcmp.eq.f32.partialorder %v1003, 8.507059e+37
  %v1005 = vand.u32 %v870, 2147483648
  %v1006 = vor.u32 1.1754944e-38, %v1005
  %v1007 = vsel %vm1004, %v1006, %v1002
  %v1008 = vmul.f32 1.0, %v1007
  %v1009 = vrcp.pop %v871
  %v1010 = vmul.f32 %v871, %v1009
  %v1011 = vsub.f32 1.0, %v1010
  %v1012 = vmul.f32 %v1009, %v1011
  %v1013 = vadd.f32 %v1009, %v1012
  %vm1014 = vweird.f32 %v871
  %vm1015 = vweird.f32 %v1009
  %vm1016 = vmor %vm1014, %vm1015
  %v1017 = vsel %vm1016, %v1009, %v1013
  %v1018 = vand.u32 2147483647, %v871
  %vm1019 = vcmp.eq.f32.partialorder %v1018, 8.507059e+37
  %v1020 = vand.u32 %v871, 2147483648
  %v1021 = vor.u32 1.1754944e-38, %v1020
  %v1022 = vsel %vm1019, %v1021, %v1017
  %v1023 = vmul.f32 1.0, %v1022
  %v1024 = vrcp.pop %v872
  %v1025 = vmul.f32 %v872, %v1024
  %v1026 = vsub.f32 1.0, %v1025
  %v1027 = vmul.f32 %v1024, %v1026
  %v1028 = vadd.f32 %v1024, %v1027
  %vm1029 = vweird.f32 %v872
  %vm1030 = vweird.f32 %v1024
  %vm1031 = vmor %vm1029, %vm1030
  %v1032 = vsel %vm1031, %v1024, %v1028
  %v1033 = vand.u32 2147483647, %v872
  %vm1034 = vcmp.eq.f32.partialorder %v1033, 8.507059e+37
  %v1035 = vand.u32 %v872, 2147483648
  %v1036 = vor.u32 1.1754944e-38, %v1035
  %v1037 = vsel %vm1034, %v1036, %v1032
  %v1038 = vmul.f32 1.0, %v1037
  %v1039 = vrcp.pop %v873
  %v1040 = vmul.f32 %v873, %v1039
  %v1041 = vsub.f32 1.0, %v1040
  %v1042 = vmul.f32 %v1039, %v1041
  %v1043 = vadd.f32 %v1039, %v1042
  %vm1044 = vweird.f32 %v873
  %vm1045 = vweird.f32 %v1039
  %vm1046 = vmor %vm1044, %vm1045
  %v1047 = vsel %vm1046, %v1039, %v1043
  %v1048 = vand.u32 2147483647, %v873
  %vm1049 = vcmp.eq.f32.partialorder %v1048, 8.507059e+37
  %v1050 = vand.u32 %v873, 2147483648
  %v1051 = vor.u32 1.1754944e-38, %v1050
  %v1052 = vsel %vm1049, %v1051, %v1047
  %v1053 = vmul.f32 1.0, %v1052
  %v1054 = vmul.f32 %v641, %v888
  %v1055 = vmul.f32 %v728, %v903
  %v1056 = vmul.f32 %v815, %v918
  %v1057 = vmul.f32 %v644, %v933
  %v1058 = vmul.f32 %v731, %v948
  %v1059 = vmul.f32 %v818, %v963
  %v1060 = vmul.f32 %v647, %v978
  %v1061 = vmul.f32 %v734, %v993
  %v1062 = vmul.f32 %v821, %v1008
  %v1063 = vmul.f32 %v650, %v1023
  %v1064 = vmul.f32 %v737, %v1038
  %v1065 = vmul.f32 %v824, %v1053
  %v1066 = vld [vmem:[%s5] sm:$0xff]
  %v1067 = vld [vmem:[%s5 + $0x8] sm:$0xff]
  %v1068 = vld [vmem:[%s5 + $0x10] sm:$0xff]
  %v1069 = vld [vmem:[%s5 + $0x18] sm:$0xff]
  %v1070 = vld [vmem:[%s5 + $0x20] sm:$0xff]
  %v1071 = vld [vmem:[%s5 + $0x28] sm:$0xff]
  %v1072 = vld [vmem:[%s5 + $0x30] sm:$0xff]
  %v1073 = vld [vmem:[%s5 + $0x38] sm:$0xff]
  %v1074 = vld [vmem:[%s5 + $0x40] sm:$0xff]
  %v1075 = vld [vmem:[%s5 + $0x48] sm:$0xff]
  %v1076 = vld [vmem:[%s5 + $0x50] sm:$0xff]
  %v1077 = vld [vmem:[%s5 + $0x58] sm:$0xff]
  %v1078 = vld [vmem:[%s5 + $0x60] sm:$0xff]
  %v1079 = vld [vmem:[%s5 + $0x68] sm:$0xff]
  %v1080 = vld [vmem:[%s5 + $0x70] sm:$0xff]
  %v1081 = vld [vmem:[%s5 + $0x78] sm:$0xff]
  %v1082 = vld [vmem:[%s5 + $0x80] sm:$0xff]
  %v1083 = vld [vmem:[%s5 + $0x88] sm:$0xff]
  %v1084 = vld [vmem:[%s5 + $0x90] sm:$0xff]
  %v1085 = vld [vmem:[%s5 + $0x98] sm:$0xff]
  %v1086 = vld [vmem:[%s5 + $0xa0] sm:$0xff]
  %v1087 = vld [vmem:[%s5 + $0xa8] sm:$0xff]
  %v1088 = vld [vmem:[%s5 + $0xb0] sm:$0xff]
  %v1089 = vld [vmem:[%s5 + $0xb8] sm:$0xff]
  %v1090 = vld [vmem:[%s5 + $0xc0] sm:$0xff]
  %v1091 = vld [vmem:[%s5 + $0xc8] sm:$0xff]
  %v1092 = vld [vmem:[%s5 + $0xd0] sm:$0xff]
  %v1093 = vld [vmem:[%s5 + $0xd8] sm:$0xff]
  %v1094 = vld [vmem:[%s5 + $0xe0] sm:$0xff]
  %v1095 = vld [vmem:[%s5 + $0xe8] sm:$0xff]
  %v1096 = vld [vmem:[%s5 + $0xf0] sm:$0xff]
  %v1097 = vld [vmem:[%s5 + $0xf8] sm:$0xff]
  %v1098 = vld [vmem:[%s5 + $0x100] sm:$0xff]
  %v1099 = vld [vmem:[%s5 + $0x108] sm:$0xff]
  %v1100 = vld [vmem:[%s5 + $0x110] sm:$0xff]
  %v1101 = vld [vmem:[%s5 + $0x118] sm:$0xff]
  %v1102 = vld [vmem:[%s5 + $0x120] sm:$0xff]
  %v1103 = vld [vmem:[%s5 + $0x128] sm:$0xff]
  %v1104 = vld [vmem:[%s5 + $0x130] sm:$0xff]
  %v1105 = vld [vmem:[%s5 + $0x138] sm:$0xff]
  %v1106 = vld [vmem:[%s5 + $0x140] sm:$0xff]
  %v1107 = vld [vmem:[%s5 + $0x148] sm:$0xff]
  %v1108 = vld [vmem:[%s5 + $0x150] sm:$0xff]
  %v1109 = vld [vmem:[%s5 + $0x158] sm:$0xff]
  %v1110 = vld [vmem:[%s5 + $0x160] sm:$0xff]
  %v1111 = vld [vmem:[%s5 + $0x168] sm:$0xff]
  %v1112 = vld [vmem:[%s5 + $0x170] sm:$0xff]
  %v1113 = vld [vmem:[%s5 + $0x178] sm:$0xff]
  %v1114 = vld [vmem:[%s6] sm:$0x1]
  %v1116 = vperm.slane %v1114, 0
  %1118 = vmatpush.msra.mxu0 %v1081
  %1119 = vmatpush.msra.mxu0 %v1080
  %1120 = vmatpush.msra.mxu0 %v1079
  %1121 = vmatpush.msra.mxu0 %v1078
  %1122 = vmatpush.msra.mxu0 %v1077
  %1123 = vmatpush.msra.mxu0 %v1076
  %1124 = vmatpush.msra.mxu0 %v1075
  %1125 = vmatpush.msra.mxu0 %v1074
  %1126 = vmatpush.msra.mxu0 %v1073
  %1127 = vmatpush.msra.mxu0 %v1072
  %1128 = vmatpush.msra.mxu0 %v1071
  %1129 = vmatpush.msra.mxu0 %v1070
  %1130 = vmatpush.msra.mxu0 %v1069
  %1131 = vmatpush.msra.mxu0 %v1068
  %1132 = vmatpush.msra.mxu0 %v1067
  %1133 = vmatpush.msra.mxu0 %v1066
  %1134 = vmatmul.f32.gmra.mxu0 %v1054
  %v1135 = vpop.f32.mrf.mxu0
  %v1136 = vadd.f32 %v1116, %v1135
  %1137 = vmatmul.f32.gmra.mxu0 %v1057
  %v1138 = vpop.f32.mrf.mxu0
  %v1139 = vadd.f32 %v1116, %v1138
  %1140 = vmatmul.f32.gmra.mxu0 %v1060
  %v1141 = vpop.f32.mrf.mxu0
  %v1142 = vadd.f32 %v1116, %v1141
  %1143 = vmatmul.f32.gmra.mxu0 %v1063
  %v1144 = vpop.f32.mrf.mxu0
  %v1145 = vadd.f32 %v1116, %v1144
  %1146 = vdwg.mxu0
  %1147 = vmatpush.msra.mxu0 %v1097
  %1148 = vmatpush.msra.mxu0 %v1096
  %1149 = vmatpush.msra.mxu0 %v1095
  %1150 = vmatpush.msra.mxu0 %v1094
  %1151 = vmatpush.msra.mxu0 %v1093
  %1152 = vmatpush.msra.mxu0 %v1092
  %1153 = vmatpush.msra.mxu0 %v1091
  %1154 = vmatpush.msra.mxu0 %v1090
  %1155 = vmatpush.msra.mxu0 %v1089
  %1156 = vmatpush.msra.mxu0 %v1088
  %1157 = vmatpush.msra.mxu0 %v1087
  %1158 = vmatpush.msra.mxu0 %v1086
  %1159 = vmatpush.msra.mxu0 %v1085
  %1160 = vmatpush.msra.mxu0 %v1084
  %1161 = vmatpush.msra.mxu0 %v1083
  %1162 = vmatpush.msra.mxu0 %v1082
  %1163 = vmatmul.f32.gmra.mxu0 %v1055
  %v1164 = vpop.f32.mrf.mxu0
  %v1165 = vadd.f32 %v1136, %v1164
  %1166 = vmatmul.f32.gmra.mxu0 %v1058
  %v1167 = vpop.f32.mrf.mxu0
  %v1168 = vadd.f32 %v1139, %v1167
  %1169 = vmatmul.f32.gmra.mxu0 %v1061
  %v1170 = vpop.f32.mrf.mxu0
  %v1171 = vadd.f32 %v1142, %v1170
  %1172 = vmatmul.f32.gmra.mxu0 %v1064
  %v1173 = vpop.f32.mrf.mxu0
  %v1174 = vadd.f32 %v1145, %v1173
  %1175 = vdwg.mxu0
  %1176 = vmatpush.msra.mxu0 %v1113
  %1177 = vmatpush.msra.mxu0 %v1112
  %1178 = vmatpush.msra.mxu0 %v1111
  %1179 = vmatpush.msra.mxu0 %v1110
  %1180 = vmatpush.msra.mxu0 %v1109
  %1181 = vmatpush.msra.mxu0 %v1108
  %1182 = vmatpush.msra.mxu0 %v1107
  %1183 = vmatpush.msra.mxu0 %v1106
  %1184 = vmatpush.msra.mxu0 %v1105
  %1185 = vmatpush.msra.mxu0 %v1104
  %1186 = vmatpush.msra.mxu0 %v1103
  %1187 = vmatpush.msra.mxu0 %v1102
  %1188 = vmatpush.msra.mxu0 %v1101
  %1189 = vmatpush.msra.mxu0 %v1100
  %1190 = vmatpush.msra.mxu0 %v1099
  %1191 = vmatpush.msra.mxu0 %v1098
  %1192 = vmatmul.f32.gmra.mxu0 %v1056
  %v1193 = vpop.f32.mrf.mxu0
  %v1194 = vadd.f32 %v1165, %v1193
  %1195 = vmatmul.f32.gmra.mxu0 %v1059
  %v1196 = vpop.f32.mrf.mxu0
  %v1197 = vadd.f32 %v1168, %v1196
  %1198 = vmatmul.f32.gmra.mxu0 %v1062
  %v1199 = vpop.f32.mrf.mxu0
  %v1200 = vadd.f32 %v1171, %v1199
  %1201 = vmatmul.f32.gmra.mxu0 %v1065
  %v1202 = vpop.f32.mrf.mxu0
  %v1203 = vadd.f32 %v1174, %v1202
  %1204 = vdwg.mxu0
  %1205 = vst [vmem:[%s7] sm:$0xff] %v1194
  %1206 = vst [vmem:[%s7 + $0x8] sm:$0xff] %v1197
  %1207 = vst [vmem:[%s7 + $0x10] sm:$0xff] %v1200
  %1208 = vst [vmem:[%s7 + $0x18] sm:$0xff] %v1203
  // Predicated region
  $region30: #{gnpools_mlp_forward.2} parent=0 // pred_check
    _
  $region31: #{gnpools_mlp_forward.2} parent=0 // pred_check_branch
    %1210 = sbr.rel (0) target = $region33
  $region32: #{gnpools_mlp_forward.2} parent=0 // pred_region
    _
  $region33: #{gnpools_mlp_forward.2} parent=0 // pred_fallthru
    _
  // Predicated region
  $region34: #{gnpools_mlp_forward.2} parent=0 // pred_check
    _
  $region35: #{gnpools_mlp_forward.2} parent=0 // pred_check_branch
    %1212 = sbr.rel (0) target = $region37
  $region36: #{gnpools_mlp_forward.2} parent=0 // pred_region
    _
  $region37: #{gnpools_mlp_forward.2} parent=0 // pred_fallthru
    _

// kernel: gnpools_mlp_forward.3
$region0: #{gnpools_mlp_forward.3}
  #allocation0 [shape = 'u32[]', space=smem, size = 0x4, offset = 0x4, fixed_abs, tag = 'smem constant byte address 0x4 - core index']
  #allocation1 [shape = 'u32[72,128]{1,0:T(1,128)}', space=vmem, size = 0x9000, scoped, tag = 'internal scratch']
  #allocation2 [shape = 'f32[8,128]{1,0:T(8,128)}', space=vmem, size = 0x1000, scoped, tag = 'scratch operand']
  %s0 = inlined_call_operand.vmem [shape: f32[16,128], index: 0, kind: input, shape index: {}]
  %s1 = inlined_call_operand.vmem [shape: f32[8,16], index: 1, kind: input, shape index: {}]
  %s2 = inlined_call_operand.vmem [shape: f32[128,384], index: 2, kind: input, shape index: {}]
  %s3 = inlined_call_operand.vmem [shape: f32[1,384], index: 3, kind: input, shape index: {}]
  %s4 = inlined_call_operand.vmem [shape: f32[384,384], index: 4, kind: input, shape index: {}]
  %s5 = inlined_call_operand.vmem [shape: f32[1,384], index: 5, kind: input, shape index: {}]
  %s6 = inlined_call_operand.vmem [shape: f32[384,128], index: 6, kind: input, shape index: {}]
  %s7 = inlined_call_operand.vmem [shape: f32[1,128], index: 7, kind: input, shape index: {}]
  %s8 = inlined_call_operand.vmem [shape: f32[128,128], index: 8, kind: input, shape index: {}]
  %s9 = inlined_call_operand.vmem [shape: f32[1,128], index: 9, kind: input, shape index: {}]
  %s10 = inlined_call_operand.vmem [shape: f32[128,128], index: 10, kind: input, shape index: {}]
  %s11 = inlined_call_operand.vmem [shape: f32[1,128], index: 11, kind: input, shape index: {}]
  %s12 = inlined_call_operand.vmem [shape: f32[8,128], index: 12, kind: output, shape index: {}]
  %s13 = sld [smem:[#allocation0]]
  $region66: #{gnpools_mlp_forward.3} parent=0
    _
  %s15 = ssub.s32 1, %s13
  %s16 = scalar_select 0, %s15, %s13
  // Predicated region
  $region2: #{gnpools_mlp_forward.3} parent=0 // pred_check
    _
  $region3: #{gnpools_mlp_forward.3} parent=0 // pred_check_branch
    %18 = sbr.rel (0) target = $region5
  $region4: #{gnpools_mlp_forward.3} parent=0 // pred_region
    _
  $region5: #{gnpools_mlp_forward.3} parent=0 // pred_fallthru
    _
  // Predicated region
  $region6: #{gnpools_mlp_forward.3} parent=0 // pred_check
    _
  $region7: #{gnpools_mlp_forward.3} parent=0 // pred_check_branch
    %20 = sbr.rel (0) target = $region9
  $region8: #{gnpools_mlp_forward.3} parent=0 // pred_region
    _
  $region9: #{gnpools_mlp_forward.3} parent=0 // pred_fallthru
    _
  // Predicated region
  $region10: #{gnpools_mlp_forward.3} parent=0 // pred_check
    _
  $region11: #{gnpools_mlp_forward.3} parent=0 // pred_check_branch
    %22 = sbr.rel (0) target = $region13
  $region12: #{gnpools_mlp_forward.3} parent=0 // pred_region
    _
  $region13: #{gnpools_mlp_forward.3} parent=0 // pred_fallthru
    _
  // Predicated region
  $region14: #{gnpools_mlp_forward.3} parent=0 // pred_check
    _
  $region15: #{gnpools_mlp_forward.3} parent=0 // pred_check_branch
    %24 = sbr.rel (0) target = $region17
  $region16: #{gnpools_mlp_forward.3} parent=0 // pred_region
    _
  $region17: #{gnpools_mlp_forward.3} parent=0 // pred_fallthru
    _
  // Predicated region
  $region18: #{gnpools_mlp_forward.3} parent=0 // pred_check
    _
  $region19: #{gnpools_mlp_forward.3} parent=0 // pred_check_branch
    %26 = sbr.rel (0) target = $region21
  $region20: #{gnpools_mlp_forward.3} parent=0 // pred_region
    _
  $region21: #{gnpools_mlp_forward.3} parent=0 // pred_fallthru
    _
  // Predicated region
  $region22: #{gnpools_mlp_forward.3} parent=0 // pred_check
    _
  $region23: #{gnpools_mlp_forward.3} parent=0 // pred_check_branch
    %28 = sbr.rel (0) target = $region25
  $region24: #{gnpools_mlp_forward.3} parent=0 // pred_region
    _
  $region25: #{gnpools_mlp_forward.3} parent=0 // pred_fallthru
    _
  // Predicated region
  $region26: #{gnpools_mlp_forward.3} parent=0 // pred_check
    _
  $region27: #{gnpools_mlp_forward.3} parent=0 // pred_check_branch
    %30 = sbr.rel (0) target = $region29
  $region28: #{gnpools_mlp_forward.3} parent=0 // pred_region
    _
  $region29: #{gnpools_mlp_forward.3} parent=0 // pred_fallthru
    _
  // Predicated region
  $region30: #{gnpools_mlp_forward.3} parent=0 // pred_check
    _
  $region31: #{gnpools_mlp_forward.3} parent=0 // pred_check_branch
    %32 = sbr.rel (0) target = $region33
  $region32: #{gnpools_mlp_forward.3} parent=0 // pred_region
    _
  $region33: #{gnpools_mlp_forward.3} parent=0 // pred_fallthru
    _
  // Predicated region
  $region34: #{gnpools_mlp_forward.3} parent=0 // pred_check
    _
  $region35: #{gnpools_mlp_forward.3} parent=0 // pred_check_branch
    %34 = sbr.rel (0) target = $region37
  $region36: #{gnpools_mlp_forward.3} parent=0 // pred_region
    _
  $region37: #{gnpools_mlp_forward.3} parent=0 // pred_fallthru
    _
  // Predicated region
  $region38: #{gnpools_mlp_forward.3} parent=0 // pred_check
    _
  $region39: #{gnpools_mlp_forward.3} parent=0 // pred_check_branch
    %36 = sbr.rel (0) target = $region41
  $region40: #{gnpools_mlp_forward.3} parent=0 // pred_region
    _
  $region41: #{gnpools_mlp_forward.3} parent=0 // pred_fallthru
    _
  // Predicated region
  $region42: #{gnpools_mlp_forward.3} parent=0 // pred_check
    _
  $region43: #{gnpools_mlp_forward.3} parent=0 // pred_check_branch
    %38 = sbr.rel (0) target = $region45
  $region44: #{gnpools_mlp_forward.3} parent=0 // pred_region
    _
  $region45: #{gnpools_mlp_forward.3} parent=0 // pred_fallthru
    _
  // Predicated region
  $region46: #{gnpools_mlp_forward.3} parent=0 // pred_check
    _
  $region47: #{gnpools_mlp_forward.3} parent=0 // pred_check_branch
    %40 = sbr.rel (0) target = $region49
  $region48: #{gnpools_mlp_forward.3} parent=0 // pred_region
    _
  $region49: #{gnpools_mlp_forward.3} parent=0 // pred_fallthru
    _
  %p41 = scmp.eq.s32.totalorder 0, 0
  // Predicated region
  $region50: #{gnpools_mlp_forward.3} parent=0 // pred_check
    %p42 = pneg %p41
  $region51: #{gnpools_mlp_forward.3} parent=0 // pred_check_branch
    %44 = sbr.rel (%p42) target = $region53
  $region52: #{gnpools_mlp_forward.3} parent=0 // pred_region
    %45 = vst [vmem:[#allocation2] sm:$0xff] 0.0
    %46 = vst [vmem:[%s12] sm:$0xff] 0.0
  $region53: #{gnpools_mlp_forward.3} parent=0 // pred_fallthru
    _
  %v47 = vld [vmem:[%s0] sm:$0xff]
  %v48 = vld [vmem:[%s0 + $0x8] sm:$0xff]
  %v49 = vld [vmem:[%s2] sm:$0xff]
  %v50 = vld [vmem:[%s2 + $0x8] sm:$0xff]
  %v51 = vld [vmem:[%s2 + $0x10] sm:$0xff]
  %v52 = vld [vmem:[%s2 + $0x18] sm:$0xff]
  %v53 = vld [vmem:[%s2 + $0x20] sm:$0xff]
  %v54 = vld [vmem:[%s2 + $0x28] sm:$0xff]
  %v55 = vld [vmem:[%s2 + $0x30] sm:$0xff]
  %v56 = vld [vmem:[%s2 + $0x38] sm:$0xff]
  %v57 = vld [vmem:[%s2 + $0x40] sm:$0xff]
  %v58 = vld [vmem:[%s2 + $0x48] sm:$0xff]
  %v59 = vld [vmem:[%s2 + $0x50] sm:$0xff]
  %v60 = vld [vmem:[%s2 + $0x58] sm:$0xff]
  %v61 = vld [vmem:[%s2 + $0x60] sm:$0xff]
  %v62 = vld [vmem:[%s2 + $0x68] sm:$0xff]
  %v63 = vld [vmem:[%s2 + $0x70] sm:$0xff]
  %v64 = vld [vmem:[%s2 + $0x78] sm:$0xff]
  %v65 = vld [vmem:[%s2 + $0x80] sm:$0xff]
  %v66 = vld [vmem:[%s2 + $0x88] sm:$0xff]
  %v67 = vld [vmem:[%s2 + $0x90] sm:$0xff]
  %v68 = vld [vmem:[%s2 + $0x98] sm:$0xff]
  %v69 = vld [vmem:[%s2 + $0xa0] sm:$0xff]
  %v70 = vld [vmem:[%s2 + $0xa8] sm:$0xff]
  %v71 = vld [vmem:[%s2 + $0xb0] sm:$0xff]
  %v72 = vld [vmem:[%s2 + $0xb8] sm:$0xff]
  %v73 = vld [vmem:[%s2 + $0xc0] sm:$0xff]
  %v74 = vld [vmem:[%s2 + $0xc8] sm:$0xff]
  %v75 = vld [vmem:[%s2 + $0xd0] sm:$0xff]
  %v76 = vld [vmem:[%s2 + $0xd8] sm:$0xff]
  %v77 = vld [vmem:[%s2 + $0xe0] sm:$0xff]
  %v78 = vld [vmem:[%s2 + $0xe8] sm:$0xff]
  %v79 = vld [vmem:[%s2 + $0xf0] sm:$0xff]
  %v80 = vld [vmem:[%s2 + $0xf8] sm:$0xff]
  %v81 = vld [vmem:[%s2 + $0x100] sm:$0xff]
  %v82 = vld [vmem:[%s2 + $0x108] sm:$0xff]
  %v83 = vld [vmem:[%s2 + $0x110] sm:$0xff]
  %v84 = vld [vmem:[%s2 + $0x118] sm:$0xff]
  %v85 = vld [vmem:[%s2 + $0x120] sm:$0xff]
  %v86 = vld [vmem:[%s2 + $0x128] sm:$0xff]
  %v87 = vld [vmem:[%s2 + $0x130] sm:$0xff]
  %v88 = vld [vmem:[%s2 + $0x138] sm:$0xff]
  %v89 = vld [vmem:[%s2 + $0x140] sm:$0xff]
  %v90 = vld [vmem:[%s2 + $0x148] sm:$0xff]
  %v91 = vld [vmem:[%s2 + $0x150] sm:$0xff]
  %v92 = vld [vmem:[%s2 + $0x158] sm:$0xff]
  %v93 = vld [vmem:[%s2 + $0x160] sm:$0xff]
  %v94 = vld [vmem:[%s2 + $0x168] sm:$0xff]
  %v95 = vld [vmem:[%s2 + $0x170] sm:$0xff]
  %v96 = vld [vmem:[%s2 + $0x178] sm:$0xff]
  %v97 = vld [vmem:[%s3] sm:$0x7]
  %v99 = vperm.slane %v97, 0
  %v100 = vperm.slane %v97, 1
  %v101 = vperm.slane %v97, 2
  %105 = vmatpush.msra.mxu0 %v94
  %106 = vmatpush.msra.mxu0 %v91
  %107 = vmatpush.msra.mxu0 %v88
  %108 = vmatpush.msra.mxu0 %v85
  %109 = vmatpush.msra.mxu0 %v82
  %110 = vmatpush.msra.mxu0 %v79
  %111 = vmatpush.msra.mxu0 %v76
  %112 = vmatpush.msra.mxu0 %v73
  %113 = vmatpush.msra.mxu0 %v70
  %114 = vmatpush.msra.mxu0 %v67
  %115 = vmatpush.msra.mxu0 %v64
  %116 = vmatpush.msra.mxu0 %v61
  %117 = vmatpush.msra.mxu0 %v58
  %118 = vmatpush.msra.mxu0 %v55
  %119 = vmatpush.msra.mxu0 %v52
  %120 = vmatpush.msra.mxu0 %v49
  %121 = vmatmul.f32.gmra.mxu0 %v47
  %v122 = vpop.f32.mrf.mxu0
  %v123 = vadd.f32 %v99, %v122
  %124 = vmatmul.f32.gmra.mxu0 %v48
  %v125 = vpop.f32.mrf.mxu0
  %v126 = vadd.f32 %v99, %v125
  %127 = vdwg.mxu0
  %128 = vmatpush.msra.mxu0 %v95
  %129 = vmatpush.msra.mxu0 %v92
  %130 = vmatpush.msra.mxu0 %v89
  %131 = vmatpush.msra.mxu0 %v86
  %132 = vmatpush.msra.mxu0 %v83
  %133 = vmatpush.msra.mxu0 %v80
  %134 = vmatpush.msra.mxu0 %v77
  %135 = vmatpush.msra.mxu0 %v74
  %136 = vmatpush.msra.mxu0 %v71
  %137 = vmatpush.msra.mxu0 %v68
  %138 = vmatpush.msra.mxu0 %v65
  %139 = vmatpush.msra.mxu0 %v62
  %140 = vmatpush.msra.mxu0 %v59
  %141 = vmatpush.msra.mxu0 %v56
  %142 = vmatpush.msra.mxu0 %v53
  %143 = vmatpush.msra.mxu0 %v50
  %144 = vmatmul.f32.gmra.mxu0 %v47
  %v145 = vpop.f32.mrf.mxu0
  %v146 = vadd.f32 %v100, %v145
  %147 = vmatmul.f32.gmra.mxu0 %v48
  %v148 = vpop.f32.mrf.mxu0
  %v149 = vadd.f32 %v100, %v148
  %150 = vdwg.mxu0
  %151 = vmatpush.msra.mxu0 %v96
  %152 = vmatpush.msra.mxu0 %v93
  %153 = vmatpush.msra.mxu0 %v90
  %154 = vmatpush.msra.mxu0 %v87
  %155 = vmatpush.msra.mxu0 %v84
  %156 = vmatpush.msra.mxu0 %v81
  %157 = vmatpush.msra.mxu0 %v78
  %158 = vmatpush.msra.mxu0 %v75
  %159 = vmatpush.msra.mxu0 %v72
  %160 = vmatpush.msra.mxu0 %v69
  %161 = vmatpush.msra.mxu0 %v66
  %162 = vmatpush.msra.mxu0 %v63
  %163 = vmatpush.msra.mxu0 %v60
  %164 = vmatpush.msra.mxu0 %v57
  %165 = vmatpush.msra.mxu0 %v54
  %166 = vmatpush.msra.mxu0 %v51
  %167 = vmatmul.f32.gmra.mxu0 %v47
  %v168 = vpop.f32.mrf.mxu0
  %v169 = vadd.f32 %v101, %v168
  %170 = vmatmul.f32.gmra.mxu0 %v48
  %v171 = vpop.f32.mrf.mxu0
  %v172 = vadd.f32 %v101, %v171
  %173 = vdwg.mxu0
  %v174 = vxor.u32 %v123, 2147483648
  %v175 = vxor.u32 %v146, 2147483648
  %v176 = vxor.u32 %v169, 2147483648
  %v177 = vxor.u32 %v126, 2147483648
  %v178 = vxor.u32 %v149, 2147483648
  %v179 = vxor.u32 %v172, 2147483648
  %v180 = vmul.f32 %v174, 1.442695
  %v181 = vpow.pop %v180
  %v182 = vmul.f32 %v175, 1.442695
  %v183 = vpow.pop %v182
  %v184 = vmul.f32 %v176, 1.442695
  %v185 = vpow.pop %v184
  %v186 = vmul.f32 %v177, 1.442695
  %v187 = vpow.pop %v186
  %v188 = vmul.f32 %v178, 1.442695
  %v189 = vpow.pop %v188
  %v190 = vmul.f32 %v179, 1.442695
  %v191 = vpow.pop %v190
  %v192 = vadd.f32 %v181, 1.0
  %v193 = vadd.f32 %v183, 1.0
  %v194 = vadd.f32 %v185, 1.0
  %v195 = vadd.f32 %v187, 1.0
  %v196 = vadd.f32 %v189, 1.0
  %v197 = vadd.f32 %v191, 1.0
  %v198 = vrcp.pop %v192
  %v199 = vmul.f32 %v192, %v198
  %v200 = vsub.f32 1.0, %v199
  %v201 = vmul.f32 %v198, %v200
  %v202 = vadd.f32 %v198, %v201
  %vm203 = vweird.f32 %v192
  %vm204 = vweird.f32 %v198
  %vm205 = vmor %vm203, %vm204
  %v206 = vsel %vm205, %v198, %v202
  %v207 = vand.u32 2147483647, %v192
  %vm208 = vcmp.eq.f32.partialorder %v207, 8.507059e+37
  %v209 = vand.u32 %v192, 2147483648
  %v210 = vor.u32 1.1754944e-38, %v209
  %v211 = vsel %vm208, %v210, %v206
  %v212 = vmul.f32 1.0, %v211
  %v213 = vrcp.pop %v193
  %v214 = vmul.f32 %v193, %v213
  %v215 = vsub.f32 1.0, %v214
  %v216 = vmul.f32 %v213, %v215
  %v217 = vadd.f32 %v213, %v216
  %vm218 = vweird.f32 %v193
  %vm219 = vweird.f32 %v213
  %vm220 = vmor %vm218, %vm219
  %v221 = vsel %vm220, %v213, %v217
  %v222 = vand.u32 2147483647, %v193
  %vm223 = vcmp.eq.f32.partialorder %v222, 8.507059e+37
  %v224 = vand.u32 %v193, 2147483648
  %v225 = vor.u32 1.1754944e-38, %v224
  %v226 = vsel %vm223, %v225, %v221
  %v227 = vmul.f32 1.0, %v226
  %v228 = vrcp.pop %v194
  %v229 = vmul.f32 %v194, %v228
  %v230 = vsub.f32 1.0, %v229
  %v231 = vmul.f32 %v228, %v230
  %v232 = vadd.f32 %v228, %v231
  %vm233 = vweird.f32 %v194
  %vm234 = vweird.f32 %v228
  %vm235 = vmor %vm233, %vm234
  %v236 = vsel %vm235, %v228, %v232
  %v237 = vand.u32 2147483647, %v194
  %vm238 = vcmp.eq.f32.partialorder %v237, 8.507059e+37
  %v239 = vand.u32 %v194, 2147483648
  %v240 = vor.u32 1.1754944e-38, %v239
  %v241 = vsel %vm238, %v240, %v236
  %v242 = vmul.f32 1.0, %v241
  %v243 = vrcp.pop %v195
  %v244 = vmul.f32 %v195, %v243
  %v245 = vsub.f32 1.0, %v244
  %v246 = vmul.f32 %v243, %v245
  %v247 = vadd.f32 %v243, %v246
  %vm248 = vweird.f32 %v195
  %vm249 = vweird.f32 %v243
  %vm250 = vmor %vm248, %vm249
  %v251 = vsel %vm250, %v243, %v247
  %v252 = vand.u32 2147483647, %v195
  %vm253 = vcmp.eq.f32.partialorder %v252, 8.507059e+37
  %v254 = vand.u32 %v195, 2147483648
  %v255 = vor.u32 1.1754944e-38, %v254
  %v256 = vsel %vm253, %v255, %v251
  %v257 = vmul.f32 1.0, %v256
  %v258 = vrcp.pop %v196
  %v259 = vmul.f32 %v196, %v258
  %v260 = vsub.f32 1.0, %v259
  %v261 = vmul.f32 %v258, %v260
  %v262 = vadd.f32 %v258, %v261
  %vm263 = vweird.f32 %v196
  %vm264 = vweird.f32 %v258
  %vm265 = vmor %vm263, %vm264
  %v266 = vsel %vm265, %v258, %v262
  %v267 = vand.u32 2147483647, %v196
  %vm268 = vcmp.eq.f32.partialorder %v267, 8.507059e+37
  %v269 = vand.u32 %v196, 2147483648
  %v270 = vor.u32 1.1754944e-38, %v269
  %v271 = vsel %vm268, %v270, %v266
  %v272 = vmul.f32 1.0, %v271
  %v273 = vrcp.pop %v197
  %v274 = vmul.f32 %v197, %v273
  %v275 = vsub.f32 1.0, %v274
  %v276 = vmul.f32 %v273, %v275
  %v277 = vadd.f32 %v273, %v276
  %vm278 = vweird.f32 %v197
  %vm279 = vweird.f32 %v273
  %vm280 = vmor %vm278, %vm279
  %v281 = vsel %vm280, %v273, %v277
  %v282 = vand.u32 2147483647, %v197
  %vm283 = vcmp.eq.f32.partialorder %v282, 8.507059e+37
  %v284 = vand.u32 %v197, 2147483648
  %v285 = vor.u32 1.1754944e-38, %v284
  %v286 = vsel %vm283, %v285, %v281
  %v287 = vmul.f32 1.0, %v286
  %v288 = vmul.f32 %v123, %v212
  %v289 = vmul.f32 %v146, %v227
  %v290 = vmul.f32 %v169, %v242
  %v291 = vmul.f32 %v126, %v257
  %v292 = vmul.f32 %v149, %v272
  %v293 = vmul.f32 %v172, %v287
  %v294 = vld [vmem:[%s4] sm:$0xff]
  %v295 = vld [vmem:[%s4 + $0x8] sm:$0xff]
  %v296 = vld [vmem:[%s4 + $0x10] sm:$0xff]
  %v297 = vld [vmem:[%s4 + $0x18] sm:$0xff]
  %v298 = vld [vmem:[%s4 + $0x20] sm:$0xff]
  %v299 = vld [vmem:[%s4 + $0x28] sm:$0xff]
  %v300 = vld [vmem:[%s4 + $0x30] sm:$0xff]
  %v301 = vld [vmem:[%s4 + $0x38] sm:$0xff]
  %v302 = vld [vmem:[%s4 + $0x40] sm:$0xff]
  %v303 = vld [vmem:[%s4 + $0x48] sm:$0xff]
  %v304 = vld [vmem:[%s4 + $0x50] sm:$0xff]
  %v305 = vld [vmem:[%s4 + $0x58] sm:$0xff]
  %v306 = vld [vmem:[%s4 + $0x60] sm:$0xff]
  %v307 = vld [vmem:[%s4 + $0x68] sm:$0xff]
  %v308 = vld [vmem:[%s4 + $0x70] sm:$0xff]
  %v309 = vld [vmem:[%s4 + $0x78] sm:$0xff]
  %v310 = vld [vmem:[%s4 + $0x80] sm:$0xff]
  %v311 = vld [vmem:[%s4 + $0x88] sm:$0xff]
  %v312 = vld [vmem:[%s4 + $0x90] sm:$0xff]
  %v313 = vld [vmem:[%s4 + $0x98] sm:$0xff]
  %v314 = vld [vmem:[%s4 + $0xa0] sm:$0xff]
  %v315 = vld [vmem:[%s4 + $0xa8] sm:$0xff]
  %v316 = vld [vmem:[%s4 + $0xb0] sm:$0xff]
  %v317 = vld [vmem:[%s4 + $0xb8] sm:$0xff]
  %v318 = vld [vmem:[%s4 + $0xc0] sm:$0xff]
  %v319 = vld [vmem:[%s4 + $0xc8] sm:$0xff]
  %v320 = vld [vmem:[%s4 + $0xd0] sm:$0xff]
  %v321 = vld [vmem:[%s4 + $0xd8] sm:$0xff]
  %v322 = vld [vmem:[%s4 + $0xe0] sm:$0xff]
  %v323 = vld [vmem:[%s4 + $0xe8] sm:$0xff]
  %v324 = vld [vmem:[%s4 + $0xf0] sm:$0xff]
  %v325 = vld [vmem:[%s4 + $0xf8] sm:$0xff]
  %v326 = vld [vmem:[%s4 + $0x100] sm:$0xff]
  %v327 = vld [vmem:[%s4 + $0x108] sm:$0xff]
  %v328 = vld [vmem:[%s4 + $0x110] sm:$0xff]
  %v329 = vld [vmem:[%s4 + $0x118] sm:$0xff]
  %v330 = vld [vmem:[%s4 + $0x120] sm:$0xff]
  %v331 = vld [vmem:[%s4 + $0x128] sm:$0xff]
  %v332 = vld [vmem:[%s4 + $0x130] sm:$0xff]
  %v333 = vld [vmem:[%s4 + $0x138] sm:$0xff]
  %v334 = vld [vmem:[%s4 + $0x140] sm:$0xff]
  %v335 = vld [vmem:[%s4 + $0x148] sm:$0xff]
  %v336 = vld [vmem:[%s4 + $0x150] sm:$0xff]
  %v337 = vld [vmem:[%s4 + $0x158] sm:$0xff]
  %v338 = vld [vmem:[%s4 + $0x160] sm:$0xff]
  %v339 = vld [vmem:[%s4 + $0x168] sm:$0xff]
  %v340 = vld [vmem:[%s4 + $0x170] sm:$0xff]
  %v341 = vld [vmem:[%s4 + $0x178] sm:$0xff]
  %v342 = vld [vmem:[%s4 + $0x180] sm:$0xff]
  %v343 = vld [vmem:[%s4 + $0x188] sm:$0xff]
  %v344 = vld [vmem:[%s4 + $0x190] sm:$0xff]
  %v345 = vld [vmem:[%s4 + $0x198] sm:$0xff]
  %v346 = vld [vmem:[%s4 + $0x1a0] sm:$0xff]
  %v347 = vld [vmem:[%s4 + $0x1a8] sm:$0xff]
  %v348 = vld [vmem:[%s4 + $0x1b0] sm:$0xff]
  %v349 = vld [vmem:[%s4 + $0x1b8] sm:$0xff]
  %v350 = vld [vmem:[%s4 + $0x1c0] sm:$0xff]
  %v351 = vld [vmem:[%s4 + $0x1c8] sm:$0xff]
  %v352 = vld [vmem:[%s4 + $0x1d0] sm:$0xff]
  %v353 = vld [vmem:[%s4 + $0x1d8] sm:$0xff]
  %v354 = vld [vmem:[%s4 + $0x1e0] sm:$0xff]
  %v355 = vld [vmem:[%s4 + $0x1e8] sm:$0xff]
  %v356 = vld [vmem:[%s4 + $0x1f0] sm:$0xff]
  %v357 = vld [vmem:[%s4 + $0x1f8] sm:$0xff]
  %v358 = vld [vmem:[%s4 + $0x200] sm:$0xff]
  %v359 = vld [vmem:[%s4 + $0x208] sm:$0xff]
  %v360 = vld [vmem:[%s4 + $0x210] sm:$0xff]
  %v361 = vld [vmem:[%s4 + $0x218] sm:$0xff]
  %v362 = vld [vmem:[%s4 + $0x220] sm:$0xff]
  %v363 = vld [vmem:[%s4 + $0x228] sm:$0xff]
  %v364 = vld [vmem:[%s4 + $0x230] sm:$0xff]
  %v365 = vld [vmem:[%s4 + $0x238] sm:$0xff]
  %v366 = vld [vmem:[%s4 + $0x240] sm:$0xff]
  %v367 = vld [vmem:[%s4 + $0x248] sm:$0xff]
  %v368 = vld [vmem:[%s4 + $0x250] sm:$0xff]
  %v369 = vld [vmem:[%s4 + $0x258] sm:$0xff]
  %v370 = vld [vmem:[%s4 + $0x260] sm:$0xff]
  %v371 = vld [vmem:[%s4 + $0x268] sm:$0xff]
  %v372 = vld [vmem:[%s4 + $0x270] sm:$0xff]
  %v373 = vld [vmem:[%s4 + $0x278] sm:$0xff]
  %v374 = vld [vmem:[%s4 + $0x280] sm:$0xff]
  %v375 = vld [vmem:[%s4 + $0x288] sm:$0xff]
  %v376 = vld [vmem:[%s4 + $0x290] sm:$0xff]
  %v377 = vld [vmem:[%s4 + $0x298] sm:$0xff]
  %v378 = vld [vmem:[%s4 + $0x2a0] sm:$0xff]
  %v379 = vld [vmem:[%s4 + $0x2a8] sm:$0xff]
  %v380 = vld [vmem:[%s4 + $0x2b0] sm:$0xff]
  %v381 = vld [vmem:[%s4 + $0x2b8] sm:$0xff]
  %v382 = vld [vmem:[%s4 + $0x2c0] sm:$0xff]
  %v383 = vld [vmem:[%s4 + $0x2c8] sm:$0xff]
  %v384 = vld [vmem:[%s4 + $0x2d0] sm:$0xff]
  %v385 = vld [vmem:[%s4 + $0x2d8] sm:$0xff]
  %v386 = vld [vmem:[%s4 + $0x2e0] sm:$0xff]
  %v387 = vld [vmem:[%s4 + $0x2e8] sm:$0xff]
  %v388 = vld [vmem:[%s4 + $0x2f0] sm:$0xff]
  %v389 = vld [vmem:[%s4 + $0x2f8] sm:$0xff]
  %v390 = vld [vmem:[%s4 + $0x300] sm:$0xff]
  %v391 = vld [vmem:[%s4 + $0x308] sm:$0xff]
  %v392 = vld [vmem:[%s4 + $0x310] sm:$0xff]
  %v393 = vld [vmem:[%s4 + $0x318] sm:$0xff]
  %v394 = vld [vmem:[%s4 + $0x320] sm:$0xff]
  %v395 = vld [vmem:[%s4 + $0x328] sm:$0xff]
  %v396 = vld [vmem:[%s4 + $0x330] sm:$0xff]
  %v397 = vld [vmem:[%s4 + $0x338] sm:$0xff]
  %v398 = vld [vmem:[%s4 + $0x340] sm:$0xff]
  %v399 = vld [vmem:[%s4 + $0x348] sm:$0xff]
  %v400 = vld [vmem:[%s4 + $0x350] sm:$0xff]
  %v401 = vld [vmem:[%s4 + $0x358] sm:$0xff]
  %v402 = vld [vmem:[%s4 + $0x360] sm:$0xff]
  %v403 = vld [vmem:[%s4 + $0x368] sm:$0xff]
  %v404 = vld [vmem:[%s4 + $0x370] sm:$0xff]
  %v405 = vld [vmem:[%s4 + $0x378] sm:$0xff]
  %v406 = vld [vmem:[%s4 + $0x380] sm:$0xff]
  %v407 = vld [vmem:[%s4 + $0x388] sm:$0xff]
  %v408 = vld [vmem:[%s4 + $0x390] sm:$0xff]
  %v409 = vld [vmem:[%s4 + $0x398] sm:$0xff]
  %v410 = vld [vmem:[%s4 + $0x3a0] sm:$0xff]
  %v411 = vld [vmem:[%s4 + $0x3a8] sm:$0xff]
  %v412 = vld [vmem:[%s4 + $0x3b0] sm:$0xff]
  %v413 = vld [vmem:[%s4 + $0x3b8] sm:$0xff]
  %v414 = vld [vmem:[%s4 + $0x3c0] sm:$0xff]
  %v415 = vld [vmem:[%s4 + $0x3c8] sm:$0xff]
  %v416 = vld [vmem:[%s4 + $0x3d0] sm:$0xff]
  %v417 = vld [vmem:[%s4 + $0x3d8] sm:$0xff]
  %v418 = vld [vmem:[%s4 + $0x3e0] sm:$0xff]
  %v419 = vld [vmem:[%s4 + $0x3e8] sm:$0xff]
  %v420 = vld [vmem:[%s4 + $0x3f0] sm:$0xff]
  %v421 = vld [vmem:[%s4 + $0x3f8] sm:$0xff]
  %v422 = vld [vmem:[%s4 + $0x400] sm:$0xff]
  %v423 = vld [vmem:[%s4 + $0x408] sm:$0xff]
  %v424 = vld [vmem:[%s4 + $0x410] sm:$0xff]
  %v425 = vld [vmem:[%s4 + $0x418] sm:$0xff]
  %v426 = vld [vmem:[%s4 + $0x420] sm:$0xff]
  %v427 = vld [vmem:[%s4 + $0x428] sm:$0xff]
  %v428 = vld [vmem:[%s4 + $0x430] sm:$0xff]
  %v429 = vld [vmem:[%s4 + $0x438] sm:$0xff]
  %v430 = vld [vmem:[%s4 + $0x440] sm:$0xff]
  %v431 = vld [vmem:[%s4 + $0x448] sm:$0xff]
  %v432 = vld [vmem:[%s4 + $0x450] sm:$0xff]
  %v433 = vld [vmem:[%s4 + $0x458] sm:$0xff]
  %v434 = vld [vmem:[%s4 + $0x460] sm:$0xff]
  %v435 = vld [vmem:[%s4 + $0x468] sm:$0xff]
  %v436 = vld [vmem:[%s4 + $0x470] sm:$0xff]
  %v437 = vld [vmem:[%s4 + $0x478] sm:$0xff]
  %v438 = vld [vmem:[%s5] sm:$0x7]
  %v440 = vperm.slane %v438, 0
  %v441 = vperm.slane %v438, 1
  %v442 = vperm.slane %v438, 2
  %446 = vmatpush.msra.mxu0 %v339
  %447 = vmatpush.msra.mxu0 %v336
  %448 = vmatpush.msra.mxu0 %v333
  %449 = vmatpush.msra.mxu0 %v330
  %450 = vmatpush.msra.mxu0 %v327
  %451 = vmatpush.msra.mxu0 %v324
  %452 = vmatpush.msra.mxu0 %v321
  %453 = vmatpush.msra.mxu0 %v318
  %454 = vmatpush.msra.mxu0 %v315
  %455 = vmatpush.msra.mxu0 %v312
  %456 = vmatpush.msra.mxu0 %v309
  %457 = vmatpush.msra.mxu0 %v306
  %458 = vmatpush.msra.mxu0 %v303
  %459 = vmatpush.msra.mxu0 %v300
  %460 = vmatpush.msra.mxu0 %v297
  %461 = vmatpush.msra.mxu0 %v294
  %462 = vmatmul.f32.gmra.mxu0 %v288
  %v463 = vpop.f32.mrf.mxu0
  %v464 = vadd.f32 %v440, %v463
  %465 = vmatmul.f32.gmra.mxu0 %v291
  %v466 = vpop.f32.mrf.mxu0
  %v467 = vadd.f32 %v440, %v466
  %468 = vdwg.mxu0
  %469 = vmatpush.msra.mxu0 %v387
  %470 = vmatpush.msra.mxu0 %v384
  %471 = vmatpush.msra.mxu0 %v381
  %472 = vmatpush.msra.mxu0 %v378
  %473 = vmatpush.msra.mxu0 %v375
  %474 = vmatpush.msra.mxu0 %v372
  %475 = vmatpush.msra.mxu0 %v369
  %476 = vmatpush.msra.mxu0 %v366
  %477 = vmatpush.msra.mxu0 %v363
  %478 = vmatpush.msra.mxu0 %v360
  %479 = vmatpush.msra.mxu0 %v357
  %480 = vmatpush.msra.mxu0 %v354
  %481 = vmatpush.msra.mxu0 %v351
  %482 = vmatpush.msra.mxu0 %v348
  %483 = vmatpush.msra.mxu0 %v345
  %484 = vmatpush.msra.mxu0 %v342
  %485 = vmatmul.f32.gmra.mxu0 %v289
  %v486 = vpop.f32.mrf.mxu0
  %v487 = vadd.f32 %v464, %v486
  %488 = vmatmul.f32.gmra.mxu0 %v292
  %v489 = vpop.f32.mrf.mxu0
  %v490 = vadd.f32 %v467, %v489
  %491 = vdwg.mxu0
  %492 = vmatpush.msra.mxu0 %v435
  %493 = vmatpush.msra.mxu0 %v432
  %494 = vmatpush.msra.mxu0 %v429
  %495 = vmatpush.msra.mxu0 %v426
  %496 = vmatpush.msra.mxu0 %v423
  %497 = vmatpush.msra.mxu0 %v420
  %498 = vmatpush.msra.mxu0 %v417
  %499 = vmatpush.msra.mxu0 %v414
  %500 = vmatpush.msra.mxu0 %v411
  %501 = vmatpush.msra.mxu0 %v408
  %502 = vmatpush.msra.mxu0 %v405
  %503 = vmatpush.msra.mxu0 %v402
  %504 = vmatpush.msra.mxu0 %v399
  %505 = vmatpush.msra.mxu0 %v396
  %506 = vmatpush.msra.mxu0 %v393
  %507 = vmatpush.msra.mxu0 %v390
  %508 = vmatmul.f32.gmra.mxu0 %v290
  %v509 = vpop.f32.mrf.mxu0
  %v510 = vadd.f32 %v487, %v509
  %511 = vmatmul.f32.gmra.mxu0 %v293
  %v512 = vpop.f32.mrf.mxu0
  %v513 = vadd.f32 %v490, %v512
  %514 = vdwg.mxu0
  %515 = vmatpush.msra.mxu0 %v340
  %516 = vmatpush.msra.mxu0 %v337
  %517 = vmatpush.msra.mxu0 %v334
  %518 = vmatpush.msra.mxu0 %v331
  %519 = vmatpush.msra.mxu0 %v328
  %520 = vmatpush.msra.mxu0 %v325
  %521 = vmatpush.msra.mxu0 %v322
  %522 = vmatpush.msra.mxu0 %v319
  %523 = vmatpush.msra.mxu0 %v316
  %524 = vmatpush.msra.mxu0 %v313
  %525 = vmatpush.msra.mxu0 %v310
  %526 = vmatpush.msra.mxu0 %v307
  %527 = vmatpush.msra.mxu0 %v304
  %528 = vmatpush.msra.mxu0 %v301
  %529 = vmatpush.msra.mxu0 %v298
  %530 = vmatpush.msra.mxu0 %v295
  %531 = vmatmul.f32.gmra.mxu0 %v288
  %v532 = vpop.f32.mrf.mxu0
  %v533 = vadd.f32 %v441, %v532
  %534 = vmatmul.f32.gmra.mxu0 %v291
  %v535 = vpop.f32.mrf.mxu0
  %v536 = vadd.f32 %v441, %v535
  %537 = vdwg.mxu0
  %538 = vmatpush.msra.mxu0 %v388
  %539 = vmatpush.msra.mxu0 %v385
  %540 = vmatpush.msra.mxu0 %v382
  %541 = vmatpush.msra.mxu0 %v379
  %542 = vmatpush.msra.mxu0 %v376
  %543 = vmatpush.msra.mxu0 %v373
  %544 = vmatpush.msra.mxu0 %v370
  %545 = vmatpush.msra.mxu0 %v367
  %546 = vmatpush.msra.mxu0 %v364
  %547 = vmatpush.msra.mxu0 %v361
  %548 = vmatpush.msra.mxu0 %v358
  %549 = vmatpush.msra.mxu0 %v355
  %550 = vmatpush.msra.mxu0 %v352
  %551 = vmatpush.msra.mxu0 %v349
  %552 = vmatpush.msra.mxu0 %v346
  %553 = vmatpush.msra.mxu0 %v343
  %554 = vmatmul.f32.gmra.mxu0 %v289
  %v555 = vpop.f32.mrf.mxu0
  %v556 = vadd.f32 %v533, %v555
  %557 = vmatmul.f32.gmra.mxu0 %v292
  %v558 = vpop.f32.mrf.mxu0
  %v559 = vadd.f32 %v536, %v558
  %560 = vdwg.mxu0
  %561 = vmatpush.msra.mxu0 %v436
  %562 = vmatpush.msra.mxu0 %v433
  %563 = vmatpush.msra.mxu0 %v430
  %564 = vmatpush.msra.mxu0 %v427
  %565 = vmatpush.msra.mxu0 %v424
  %566 = vmatpush.msra.mxu0 %v421
  %567 = vmatpush.msra.mxu0 %v418
  %568 = vmatpush.msra.mxu0 %v415
  %569 = vmatpush.msra.mxu0 %v412
  %570 = vmatpush.msra.mxu0 %v409
  %571 = vmatpush.msra.mxu0 %v406
  %572 = vmatpush.msra.mxu0 %v403
  %573 = vmatpush.msra.mxu0 %v400
  %574 = vmatpush.msra.mxu0 %v397
  %575 = vmatpush.msra.mxu0 %v394
  %576 = vmatpush.msra.mxu0 %v391
  %577 = vmatmul.f32.gmra.mxu0 %v290
  %v578 = vpop.f32.mrf.mxu0
  %v579 = vadd.f32 %v556, %v578
  %580 = vmatmul.f32.gmra.mxu0 %v293
  %v581 = vpop.f32.mrf.mxu0
  %v582 = vadd.f32 %v559, %v581
  %583 = vdwg.mxu0
  %584 = vmatpush.msra.mxu0 %v341
  %585 = vmatpush.msra.mxu0 %v338
  %586 = vmatpush.msra.mxu0 %v335
  %587 = vmatpush.msra.mxu0 %v332
  %588 = vmatpush.msra.mxu0 %v329
  %589 = vmatpush.msra.mxu0 %v326
  %590 = vmatpush.msra.mxu0 %v323
  %591 = vmatpush.msra.mxu0 %v320
  %592 = vmatpush.msra.mxu0 %v317
  %593 = vmatpush.msra.mxu0 %v314
  %594 = vmatpush.msra.mxu0 %v311
  %595 = vmatpush.msra.mxu0 %v308
  %596 = vmatpush.msra.mxu0 %v305
  %597 = vmatpush.msra.mxu0 %v302
  %598 = vmatpush.msra.mxu0 %v299
  %599 = vmatpush.msra.mxu0 %v296
  %600 = vmatmul.f32.gmra.mxu0 %v288
  %v601 = vpop.f32.mrf.mxu0
  %v602 = vadd.f32 %v442, %v601
  %603 = vmatmul.f32.gmra.mxu0 %v291
  %v604 = vpop.f32.mrf.mxu0
  %v605 = vadd.f32 %v442, %v604
  %606 = vdwg.mxu0
  %607 = vmatpush.msra.mxu0 %v389
  %608 = vmatpush.msra.mxu0 %v386
  %609 = vmatpush.msra.mxu0 %v383
  %610 = vmatpush.msra.mxu0 %v380
  %611 = vmatpush.msra.mxu0 %v377
  %612 = vmatpush.msra.mxu0 %v374
  %613 = vmatpush.msra.mxu0 %v371
  %614 = vmatpush.msra.mxu0 %v368
  %615 = vmatpush.msra.mxu0 %v365
  %616 = vmatpush.msra.mxu0 %v362
  %617 = vmatpush.msra.mxu0 %v359
  %618 = vmatpush.msra.mxu0 %v356
  %619 = vmatpush.msra.mxu0 %v353
  %620 = vmatpush.msra.mxu0 %v350
  %621 = vmatpush.msra.mxu0 %v347
  %622 = vmatpush.msra.mxu0 %v344
  %623 = vmatmul.f32.gmra.mxu0 %v289
  %v624 = vpop.f32.mrf.mxu0
  %v625 = vadd.f32 %v602, %v624
  %626 = vmatmul.f32.gmra.mxu0 %v292
  %v627 = vpop.f32.mrf.mxu0
  %v628 = vadd.f32 %v605, %v627
  %629 = vdwg.mxu0
  %630 = vmatpush.msra.mxu0 %v437
  %631 = vmatpush.msra.mxu0 %v434
  %632 = vmatpush.msra.mxu0 %v431
  %633 = vmatpush.msra.mxu0 %v428
  %634 = vmatpush.msra.mxu0 %v425
  %635 = vmatpush.msra.mxu0 %v422
  %636 = vmatpush.msra.mxu0 %v419
  %637 = vmatpush.msra.mxu0 %v416
  %638 = vmatpush.msra.mxu0 %v413
  %639 = vmatpush.msra.mxu0 %v410
  %640 = vmatpush.msra.mxu0 %v407
  %641 = vmatpush.msra.mxu0 %v404
  %642 = vmatpush.msra.mxu0 %v401
  %643 = vmatpush.msra.mxu0 %v398
  %644 = vmatpush.msra.mxu0 %v395
  %645 = vmatpush.msra.mxu0 %v392
  %646 = vmatmul.f32.gmra.mxu0 %v290
  %v647 = vpop.f32.mrf.mxu0
  %v648 = vadd.f32 %v625, %v647
  %649 = vmatmul.f32.gmra.mxu0 %v293
  %v650 = vpop.f32.mrf.mxu0
  %v651 = vadd.f32 %v628, %v650
  %652 = vdwg.mxu0
  %v653 = vxor.u32 %v510, 2147483648
  %v654 = vxor.u32 %v579, 2147483648
  %v655 = vxor.u32 %v648, 2147483648
  %v656 = vxor.u32 %v513, 2147483648
  %v657 = vxor.u32 %v582, 2147483648
  %v658 = vxor.u32 %v651, 2147483648
  %v659 = vmul.f32 %v653, 1.442695
  %v660 = vpow.pop %v659
  %v661 = vmul.f32 %v654, 1.442695
  %v662 = vpow.pop %v661
  %v663 = vmul.f32 %v655, 1.442695
  %v664 = vpow.pop %v663
  %v665 = vmul.f32 %v656, 1.442695
  %v666 = vpow.pop %v665
  %v667 = vmul.f32 %v657, 1.442695
  %v668 = vpow.pop %v667
  %v669 = vmul.f32 %v658, 1.442695
  %v670 = vpow.pop %v669
  %v671 = vadd.f32 %v660, 1.0
  %v672 = vadd.f32 %v662, 1.0
  %v673 = vadd.f32 %v664, 1.0
  %v674 = vadd.f32 %v666, 1.0
  %v675 = vadd.f32 %v668, 1.0
  %v676 = vadd.f32 %v670, 1.0
  %v677 = vrcp.pop %v671
  %v678 = vmul.f32 %v671, %v677
  %v679 = vsub.f32 1.0, %v678
  %v680 = vmul.f32 %v677, %v679
  %v681 = vadd.f32 %v677, %v680
  %vm682 = vweird.f32 %v671
  %vm683 = vweird.f32 %v677
  %vm684 = vmor %vm682, %vm683
  %v685 = vsel %vm684, %v677, %v681
  %v686 = vand.u32 2147483647, %v671
  %vm687 = vcmp.eq.f32.partialorder %v686, 8.507059e+37
  %v688 = vand.u32 %v671, 2147483648
  %v689 = vor.u32 1.1754944e-38, %v688
  %v690 = vsel %vm687, %v689, %v685
  %v691 = vmul.f32 1.0, %v690
  %v692 = vrcp.pop %v672
  %v693 = vmul.f32 %v672, %v692
  %v694 = vsub.f32 1.0, %v693
  %v695 = vmul.f32 %v692, %v694
  %v696 = vadd.f32 %v692, %v695
  %vm697 = vweird.f32 %v672
  %vm698 = vweird.f32 %v692
  %vm699 = vmor %vm697, %vm698
  %v700 = vsel %vm699, %v692, %v696
  %v701 = vand.u32 2147483647, %v672
  %vm702 = vcmp.eq.f32.partialorder %v701, 8.507059e+37
  %v703 = vand.u32 %v672, 2147483648
  %v704 = vor.u32 1.1754944e-38, %v703
  %v705 = vsel %vm702, %v704, %v700
  %v706 = vmul.f32 1.0, %v705
  %v707 = vrcp.pop %v673
  %v708 = vmul.f32 %v673, %v707
  %v709 = vsub.f32 1.0, %v708
  %v710 = vmul.f32 %v707, %v709
  %v711 = vadd.f32 %v707, %v710
  %vm712 = vweird.f32 %v673
  %vm713 = vweird.f32 %v707
  %vm714 = vmor %vm712, %vm713
  %v715 = vsel %vm714, %v707, %v711
  %v716 = vand.u32 2147483647, %v673
  %vm717 = vcmp.eq.f32.partialorder %v716, 8.507059e+37
  %v718 = vand.u32 %v673, 2147483648
  %v719 = vor.u32 1.1754944e-38, %v718
  %v720 = vsel %vm717, %v719, %v715
  %v721 = vmul.f32 1.0, %v720
  %v722 = vrcp.pop %v674
  %v723 = vmul.f32 %v674, %v722
  %v724 = vsub.f32 1.0, %v723
  %v725 = vmul.f32 %v722, %v724
  %v726 = vadd.f32 %v722, %v725
  %vm727 = vweird.f32 %v674
  %vm728 = vweird.f32 %v722
  %vm729 = vmor %vm727, %vm728
  %v730 = vsel %vm729, %v722, %v726
  %v731 = vand.u32 2147483647, %v674
  %vm732 = vcmp.eq.f32.partialorder %v731, 8.507059e+37
  %v733 = vand.u32 %v674, 2147483648
  %v734 = vor.u32 1.1754944e-38, %v733
  %v735 = vsel %vm732, %v734, %v730
  %v736 = vmul.f32 1.0, %v735
  %v737 = vrcp.pop %v675
  %v738 = vmul.f32 %v675, %v737
  %v739 = vsub.f32 1.0, %v738
  %v740 = vmul.f32 %v737, %v739
  %v741 = vadd.f32 %v737, %v740
  %vm742 = vweird.f32 %v675
  %vm743 = vweird.f32 %v737
  %vm744 = vmor %vm742, %vm743
  %v745 = vsel %vm744, %v737, %v741
  %v746 = vand.u32 2147483647, %v675
  %vm747 = vcmp.eq.f32.partialorder %v746, 8.507059e+37
  %v748 = vand.u32 %v675, 2147483648
  %v749 = vor.u32 1.1754944e-38, %v748
  %v750 = vsel %vm747, %v749, %v745
  %v751 = vmul.f32 1.0, %v750
  %v752 = vrcp.pop %v676
  %v753 = vmul.f32 %v676, %v752
  %v754 = vsub.f32 1.0, %v753
  %v755 = vmul.f32 %v752, %v754
  %v756 = vadd.f32 %v752, %v755
  %vm757 = vweird.f32 %v676
  %vm758 = vweird.f32 %v752
  %vm759 = vmor %vm757, %vm758
  %v760 = vsel %vm759, %v752, %v756
  %v761 = vand.u32 2147483647, %v676
  %vm762 = vcmp.eq.f32.partialorder %v761, 8.507059e+37
  %v763 = vand.u32 %v676, 2147483648
  %v764 = vor.u32 1.1754944e-38, %v763
  %v765 = vsel %vm762, %v764, %v760
  %v766 = vmul.f32 1.0, %v765
  %v767 = vmul.f32 %v510, %v691
  %v768 = vmul.f32 %v579, %v706
  %v769 = vmul.f32 %v648, %v721
  %v770 = vmul.f32 %v513, %v736
  %v771 = vmul.f32 %v582, %v751
  %v772 = vmul.f32 %v651, %v766
  %v773 = vld [vmem:[%s6] sm:$0xff]
  %v774 = vld [vmem:[%s6 + $0x8] sm:$0xff]
  %v775 = vld [vmem:[%s6 + $0x10] sm:$0xff]
  %v776 = vld [vmem:[%s6 + $0x18] sm:$0xff]
  %v777 = vld [vmem:[%s6 + $0x20] sm:$0xff]
  %v778 = vld [vmem:[%s6 + $0x28] sm:$0xff]
  %v779 = vld [vmem:[%s6 + $0x30] sm:$0xff]
  %v780 = vld [vmem:[%s6 + $0x38] sm:$0xff]
  %v781 = vld [vmem:[%s6 + $0x40] sm:$0xff]
  %v782 = vld [vmem:[%s6 + $0x48] sm:$0xff]
  %v783 = vld [vmem:[%s6 + $0x50] sm:$0xff]
  %v784 = vld [vmem:[%s6 + $0x58] sm:$0xff]
  %v785 = vld [vmem:[%s6 + $0x60] sm:$0xff]
  %v786 = vld [vmem:[%s6 + $0x68] sm:$0xff]
  %v787 = vld [vmem:[%s6 + $0x70] sm:$0xff]
  %v788 = vld [vmem:[%s6 + $0x78] sm:$0xff]
  %v789 = vld [vmem:[%s6 + $0x80] sm:$0xff]
  %v790 = vld [vmem:[%s6 + $0x88] sm:$0xff]
  %v791 = vld [vmem:[%s6 + $0x90] sm:$0xff]
  %v792 = vld [vmem:[%s6 + $0x98] sm:$0xff]
  %v793 = vld [vmem:[%s6 + $0xa0] sm:$0xff]
  %v794 = vld [vmem:[%s6 + $0xa8] sm:$0xff]
  %v795 = vld [vmem:[%s6 + $0xb0] sm:$0xff]
  %v796 = vld [vmem:[%s6 + $0xb8] sm:$0xff]
  %v797 = vld [vmem:[%s6 + $0xc0] sm:$0xff]
  %v798 = vld [vmem:[%s6 + $0xc8] sm:$0xff]
  %v799 = vld [vmem:[%s6 + $0xd0] sm:$0xff]
  %v800 = vld [vmem:[%s6 + $0xd8] sm:$0xff]
  %v801 = vld [vmem:[%s6 + $0xe0] sm:$0xff]
  %v802 = vld [vmem:[%s6 + $0xe8] sm:$0xff]
  %v803 = vld [vmem:[%s6 + $0xf0] sm:$0xff]
  %v804 = vld [vmem:[%s6 + $0xf8] sm:$0xff]
  %v805 = vld [vmem:[%s6 + $0x100] sm:$0xff]
  %v806 = vld [vmem:[%s6 + $0x108] sm:$0xff]
  %v807 = vld [vmem:[%s6 + $0x110] sm:$0xff]
  %v808 = vld [vmem:[%s6 + $0x118] sm:$0xff]
  %v809 = vld [vmem:[%s6 + $0x120] sm:$0xff]
  %v810 = vld [vmem:[%s6 + $0x128] sm:$0xff]
  %v811 = vld [vmem:[%s6 + $0x130] sm:$0xff]
  %v812 = vld [vmem:[%s6 + $0x138] sm:$0xff]
  %v813 = vld [vmem:[%s6 + $0x140] sm:$0xff]
  %v814 = vld [vmem:[%s6 + $0x148] sm:$0xff]
  %v815 = vld [vmem:[%s6 + $0x150] sm:$0xff]
  %v816 = vld [vmem:[%s6 + $0x158] sm:$0xff]
  %v817 = vld [vmem:[%s6 + $0x160] sm:$0xff]
  %v818 = vld [vmem:[%s6 + $0x168] sm:$0xff]
  %v819 = vld [vmem:[%s6 + $0x170] sm:$0xff]
  %v820 = vld [vmem:[%s6 + $0x178] sm:$0xff]
  %v821 = vld [vmem:[%s7] sm:$0x1]
  %v823 = vperm.slane %v821, 0
  %825 = vmatpush.msra.mxu0 %v788
  %826 = vmatpush.msra.mxu0 %v787
  %827 = vmatpush.msra.mxu0 %v786
  %828 = vmatpush.msra.mxu0 %v785
  %829 = vmatpush.msra.mxu0 %v784
  %830 = vmatpush.msra.mxu0 %v783
  %831 = vmatpush.msra.mxu0 %v782
  %832 = vmatpush.msra.mxu0 %v781
  %833 = vmatpush.msra.mxu0 %v780
  %834 = vmatpush.msra.mxu0 %v779
  %835 = vmatpush.msra.mxu0 %v778
  %836 = vmatpush.msra.mxu0 %v777
  %837 = vmatpush.msra.mxu0 %v776
  %838 = vmatpush.msra.mxu0 %v775
  %839 = vmatpush.msra.mxu0 %v774
  %840 = vmatpush.msra.mxu0 %v773
  %841 = vmatmul.f32.gmra.mxu0 %v767
  %v842 = vpop.f32.mrf.mxu0
  %v843 = vadd.f32 %v823, %v842
  %844 = vmatmul.f32.gmra.mxu0 %v770
  %v845 = vpop.f32.mrf.mxu0
  %v846 = vadd.f32 %v823, %v845
  %847 = vdwg.mxu0
  %848 = vmatpush.msra.mxu0 %v804
  %849 = vmatpush.msra.mxu0 %v803
  %850 = vmatpush.msra.mxu0 %v802
  %851 = vmatpush.msra.mxu0 %v801
  %852 = vmatpush.msra.mxu0 %v800
  %853 = vmatpush.msra.mxu0 %v799
  %854 = vmatpush.msra.mxu0 %v798
  %855 = vmatpush.msra.mxu0 %v797
  %856 = vmatpush.msra.mxu0 %v796
  %857 = vmatpush.msra.mxu0 %v795
  %858 = vmatpush.msra.mxu0 %v794
  %859 = vmatpush.msra.mxu0 %v793
  %860 = vmatpush.msra.mxu0 %v792
  %861 = vmatpush.msra.mxu0 %v791
  %862 = vmatpush.msra.mxu0 %v790
  %863 = vmatpush.msra.mxu0 %v789
  %864 = vmatmul.f32.gmra.mxu0 %v768
  %v865 = vpop.f32.mrf.mxu0
  %v866 = vadd.f32 %v843, %v865
  %867 = vmatmul.f32.gmra.mxu0 %v771
  %v868 = vpop.f32.mrf.mxu0
  %v869 = vadd.f32 %v846, %v868
  %870 = vdwg.mxu0
  %871 = vmatpush.msra.mxu0 %v820
  %872 = vmatpush.msra.mxu0 %v819
  %873 = vmatpush.msra.mxu0 %v818
  %874 = vmatpush.msra.mxu0 %v817
  %875 = vmatpush.msra.mxu0 %v816
  %876 = vmatpush.msra.mxu0 %v815
  %877 = vmatpush.msra.mxu0 %v814
  %878 = vmatpush.msra.mxu0 %v813
  %879 = vmatpush.msra.mxu0 %v812
  %880 = vmatpush.msra.mxu0 %v811
  %881 = vmatpush.msra.mxu0 %v810
  %882 = vmatpush.msra.mxu0 %v809
  %883 = vmatpush.msra.mxu0 %v808
  %884 = vmatpush.msra.mxu0 %v807
  %885 = vmatpush.msra.mxu0 %v806
  %886 = vmatpush.msra.mxu0 %v805
  %887 = vmatmul.f32.gmra.mxu0 %v769
  %v888 = vpop.f32.mrf.mxu0
  %v889 = vadd.f32 %v866, %v888
  %890 = vmatmul.f32.gmra.mxu0 %v772
  %v891 = vpop.f32.mrf.mxu0
  %v892 = vadd.f32 %v869, %v891
  %893 = vdwg.mxu0
  %v894 = vld [vmem:[#allocation2] sm:$0xff]
  %v895 = vld [vmem:[%s1] sm:$0xff]
  %vm896 = vcmask 130048
  %v898 = vsel %vm896, %v895, 0
  %900 = vmatpush.msra.mxu0 0.0
  %901 = vmatpush.msra.mxu0 0.0
  %902 = vmatpush.msra.mxu0 0.0
  %903 = vmatpush.msra.mxu0 0.0
  %904 = vmatpush.msra.mxu0 0.0
  %905 = vmatpush.msra.mxu0 0.0
  %906 = vmatpush.msra.mxu0 0.0
  %907 = vmatpush.msra.mxu0 0.0
  %908 = vmatpush.msra.mxu0 0.0
  %909 = vmatpush.msra.mxu0 0.0
  %910 = vmatpush.msra.mxu0 0.0
  %911 = vmatpush.msra.mxu0 0.0
  %912 = vmatpush.msra.mxu0 0.0
  %913 = vmatpush.msra.mxu0 0.0
  %914 = vmatpush.msra.mxu0 %v892
  %915 = vmatpush.msra.mxu0 %v889
  %916 = vmatmul.f32.gmra.mxu0 %v898
  %v917 = vpop.f32.mrf.mxu0
  %v918 = vadd.f32 0.0, %v917
  %919 = vdwg.mxu0
  %v920 = vadd.f32 %v894, %v918
  %921 = vst [vmem:[#allocation2] sm:$0xff] %v920
  // Predicated region
  $region54: #{gnpools_mlp_forward.3} parent=0 // pred_check
    %p922 = pneg %p41
  $region55: #{gnpools_mlp_forward.3} parent=0 // pred_check_branch
    %924 = sbr.rel (%p922) target = $region57
  $region56: #{gnpools_mlp_forward.3} parent=0 // pred_region
    %v925 = vld [vmem:[#allocation2] sm:$0xff]
    %v926 = vld [vmem:[%s8] sm:$0xff]
    %v927 = vld [vmem:[%s8 + $0x8] sm:$0xff]
    %v928 = vld [vmem:[%s8 + $0x10] sm:$0xff]
    %v929 = vld [vmem:[%s8 + $0x18] sm:$0xff]
    %v930 = vld [vmem:[%s8 + $0x20] sm:$0xff]
    %v931 = vld [vmem:[%s8 + $0x28] sm:$0xff]
    %v932 = vld [vmem:[%s8 + $0x30] sm:$0xff]
    %v933 = vld [vmem:[%s8 + $0x38] sm:$0xff]
    %v934 = vld [vmem:[%s8 + $0x40] sm:$0xff]
    %v935 = vld [vmem:[%s8 + $0x48] sm:$0xff]
    %v936 = vld [vmem:[%s8 + $0x50] sm:$0xff]
    %v937 = vld [vmem:[%s8 + $0x58] sm:$0xff]
    %v938 = vld [vmem:[%s8 + $0x60] sm:$0xff]
    %v939 = vld [vmem:[%s8 + $0x68] sm:$0xff]
    %v940 = vld [vmem:[%s8 + $0x70] sm:$0xff]
    %v941 = vld [vmem:[%s8 + $0x78] sm:$0xff]
    %v942 = vld [vmem:[%s9] sm:$0x1]
    %v944 = vperm.slane %v942, 0
    %946 = vmatpush.msra.mxu0 %v941
    %947 = vmatpush.msra.mxu0 %v940
    %948 = vmatpush.msra.mxu0 %v939
    %949 = vmatpush.msra.mxu0 %v938
    %950 = vmatpush.msra.mxu0 %v937
    %951 = vmatpush.msra.mxu0 %v936
    %952 = vmatpush.msra.mxu0 %v935
    %953 = vmatpush.msra.mxu0 %v934
    %954 = vmatpush.msra.mxu0 %v933
    %955 = vmatpush.msra.mxu0 %v932
    %956 = vmatpush.msra.mxu0 %v931
    %957 = vmatpush.msra.mxu0 %v930
    %958 = vmatpush.msra.mxu0 %v929
    %959 = vmatpush.msra.mxu0 %v928
    %960 = vmatpush.msra.mxu0 %v927
    %961 = vmatpush.msra.mxu0 %v926
    %962 = vmatmul.f32.gmra.mxu0 %v925
    %v963 = vpop.f32.mrf.mxu0
    %v964 = vadd.f32 %v944, %v963
    %965 = vdwg.mxu0
    %v966 = vxor.u32 %v964, 2147483648
    %v967 = vmul.f32 %v966, 1.442695
    %v968 = vpow.pop %v967
    %v969 = vadd.f32 %v968, 1.0
    %v970 = vrcp.pop %v969
    %v971 = vmul.f32 %v969, %v970
    %v972 = vsub.f32 1.0, %v971
    %v973 = vmul.f32 %v970, %v972
    %v974 = vadd.f32 %v970, %v973
    %vm975 = vweird.f32 %v969
    %vm976 = vweird.f32 %v970
    %vm977 = vmor %vm975, %vm976
    %v978 = vsel %vm977, %v970, %v974
    %v979 = vand.u32 2147483647, %v969
    %vm980 = vcmp.eq.f32.partialorder %v979, 8.507059e+37
    %v981 = vand.u32 %v969, 2147483648
    %v982 = vor.u32 1.1754944e-38, %v981
    %v983 = vsel %vm980, %v982, %v978
    %v984 = vmul.f32 1.0, %v983
    %v985 = vmul.f32 %v964, %v984
    %v986 = vld [vmem:[%s10] sm:$0xff]
    %v987 = vld [vmem:[%s10 + $0x8] sm:$0xff]
    %v988 = vld [vmem:[%s10 + $0x10] sm:$0xff]
    %v989 = vld [vmem:[%s10 + $0x18] sm:$0xff]
    %v990 = vld [vmem:[%s10 + $0x20] sm:$0xff]
    %v991 = vld [vmem:[%s10 + $0x28] sm:$0xff]
    %v992 = vld [vmem:[%s10 + $0x30] sm:$0xff]
    %v993 = vld [vmem:[%s10 + $0x38] sm:$0xff]
    %v994 = vld [vmem:[%s10 + $0x40] sm:$0xff]
    %v995 = vld [vmem:[%s10 + $0x48] sm:$0xff]
    %v996 = vld [vmem:[%s10 + $0x50] sm:$0xff]
    %v997 = vld [vmem:[%s10 + $0x58] sm:$0xff]
    %v998 = vld [vmem:[%s10 + $0x60] sm:$0xff]
    %v999 = vld [vmem:[%s10 + $0x68] sm:$0xff]
    %v1000 = vld [vmem:[%s10 + $0x70] sm:$0xff]
    %v1001 = vld [vmem:[%s10 + $0x78] sm:$0xff]
    %v1002 = vld [vmem:[%s11] sm:$0x1]
    %v1004 = vperm.slane %v1002, 0
    %1006 = vmatpush.msra.mxu0 %v1001
    %1007 = vmatpush.msra.mxu0 %v1000
    %1008 = vmatpush.msra.mxu0 %v999
    %1009 = vmatpush.msra.mxu0 %v998
    %1010 = vmatpush.msra.mxu0 %v997
    %1011 = vmatpush.msra.mxu0 %v996
    %1012 = vmatpush.msra.mxu0 %v995
    %1013 = vmatpush.msra.mxu0 %v994
    %1014 = vmatpush.msra.mxu0 %v993
    %1015 = vmatpush.msra.mxu0 %v992
    %1016 = vmatpush.msra.mxu0 %v991
    %1017 = vmatpush.msra.mxu0 %v990
    %1018 = vmatpush.msra.mxu0 %v989
    %1019 = vmatpush.msra.mxu0 %v988
    %1020 = vmatpush.msra.mxu0 %v987
    %1021 = vmatpush.msra.mxu0 %v986
    %1022 = vmatmul.f32.gmra.mxu0 %v985
    %v1023 = vpop.f32.mrf.mxu0
    %v1024 = vadd.f32 %v1004, %v1023
    %1025 = vdwg.mxu0
    %1026 = vst [vmem:[%s12] sm:$0xff] %v1024
  $region57: #{gnpools_mlp_forward.3} parent=0 // pred_fallthru
    _
  // Predicated region
  $region58: #{gnpools_mlp_forward.3} parent=0 // pred_check
    _
  $region59: #{gnpools_mlp_forward.3} parent=0 // pred_check_branch
    %1028 = sbr.rel (0) target = $region61
  $region60: #{gnpools_mlp_forward.3} parent=0 // pred_region
    _
  $region61: #{gnpools_mlp_forward.3} parent=0 // pred_fallthru
    _
  // Predicated region
  $region62: #{gnpools_mlp_forward.3} parent=0 // pred_check
    _
  $region63: #{gnpools_mlp_forward.3} parent=0 // pred_check_branch
    %1030 = sbr.rel (0) target = $region65
  $region64: #{gnpools_mlp_forward.3} parent=0 // pred_region
    _
  $region65: #{gnpools_mlp_forward.3} parent=0 // pred_fallthru
    _

</llo_original>
